<compile_context>
chip_gen: v7x
topology: tpu7x:2x2x1
jax: 0.10.0
libtpu: 0.0.40
codegen_flags: <defaults>
</compile_context>

<pallas_src>
import numpy as np
import jax
import jax.numpy as jnp
from jax.experimental import pallas as pl
from jax.experimental.pallas import tpu as pltpu

CHUNK_ITERS = 128        # PDHG iterations between early-exit checks
UNROLL = 4               # manual unroll factor inside the chunk loop
MAX_CHUNKS = 120         # hard cap: 120 * 128 = 15360 iterations (old budget)
STAG_RTOL = 1e-4         # relative stagnation tol on per-chunk displacement
FEAS_TOL = 1e-2          # unscaled feasibility gate max(Gz - h, 0) for exit
BTILE = 8                # batch rows per grid step (one f32 sublane group)


def _round_up(v, m):
    return ((v + m - 1) // m) * m


def _qp_pdhg_dual_kernel(taupd_ref, c_ref, m_ref, gtsd_ref, gs_ref,
                         sigh_ref, den_ref, invsig_ref, z_ref):
    """Solve min_z 0.5*eps*||z||^2 + p^T z  s.t. G z <= h  (p = -x) via PDHG.

    Dual-space recurrence: carry u_k = z_k @ GTs (= sig * (G z_k)); then
        lam_{k+1} = relu(lam_k + 2 u_k - u_{k-1} - sig*h)
        z_{k+1}   = z_k * den - lam_{k+1} @ Gs - taupd
        u_{k+1}   = z_k @ GTsd - lam_{k+1} @ M - c      (== z_{k+1} @ GTs)
    Only lam_{k+1} @ M is on the serial critical path.
    """
    nb, npad = taupd_ref.shape
    mpad = m_ref.shape[0]

    taupd = taupd_ref[...]                                   # (nb, npad)
    cvec = c_ref[...]                                        # (nb, mpad)
    # Hoist row-vector broadcasts once (no CSE of broadcast_in_dim in loops).
    sigh = jnp.broadcast_to(sigh_ref[...], (nb, mpad))       # sig * h
    den = jnp.broadcast_to(den_ref[...], (nb, npad))         # 1/(1+tau*eps)
    invsig = jnp.broadcast_to(invsig_ref[...], (nb, mpad))   # 1/sig

    z0 = jnp.zeros((nb, npad), jnp.float32)
    lam0 = jnp.zeros((nb, mpad), jnp.float32)
    u0 = jnp.zeros((nb, mpad), jnp.float32)

    def one_iter(z, lam, u, u_prev):
        # critical path: u -> lam_new -> lam_new @ M -> u_new
        lam_new = jnp.maximum(lam + 2.0 * u - u_prev - sigh, 0.0)
        # off critical path (one full iteration of slack): z-update matmul and
        # z @ GTsd.  Weights are read from VMEM refs here (not hoisted) to
        # keep vreg pressure low; vld slots are idle in this latency-bound loop.
        z_new = (z * den
                 - jnp.dot(lam_new, gs_ref[...],
                           preferred_element_type=jnp.float32)
                 - taupd)
        u_new = (jnp.dot(z, gtsd_ref[...], preferred_element_type=jnp.float32)
                 - jnp.dot(lam_new, m_ref[...],
                           preferred_element_type=jnp.float32)
                 - cvec)
        return z_new, lam_new, u_new, u

    def run_chunk(z, lam, u, u_prev):
        def inner(_, carry):
            zc, lamc, uc, upc = carry
            for _u in range(UNROLL):          # modest manual unroll
                zc, lamc, uc, upc = one_iter(zc, lamc, uc, upc)
            return (zc, lamc, uc, upc)
        return jax.lax.fori_loop(0, CHUNK_ITERS // UNROLL, inner,
                                 (z, lam, u, u_prev))

    def cond(carry):
        _, _, _, _, it, done = carry
        return jnp.logical_and(it < MAX_CHUNKS, jnp.logical_not(done))

    def body(carry):
        z, lam, u, u_prev, it, _ = carry
        z_start = z
        z, lam, u, u_prev = run_chunk(z, lam, u, u_prev)
        # Relative stagnation of the primal iterate over the chunk ...
        delta = jnp.max(jnp.abs(z - z_start))
        znorm = jnp.maximum(1.0, jnp.max(jnp.abs(z)))
        # ... gated by explicit (unscaled) primal feasibility:
        #   (u - sig*h) / sig = G z - h   (exact since u == z @ GTs).
        feas = jnp.max(jnp.maximum((u - sigh) * invsig, 0.0))
        done = jnp.logical_and(delta < STAG_RTOL * znorm, feas < FEAS_TOL)
        return (z, lam, u, u_prev, it + 1, done)

    init = (z0, lam0, u0, u0, jnp.int32(0), jnp.array(False))
    z_fin = jax.lax.while_loop(cond, body, init)[0]
    z_ref[...] = z_fin


def build_caplayer_lp_constraints(n, C, indices_male):
    """Deterministic parameter setup, mirroring CapLayerLP.__init__ (fair_mode=1)."""
    indices_male = np.asarray(indices_male, np.float32)
    fair = indices_male.reshape(1, n)
    n_male = float(indices_male.sum())
    Clhs = np.ones((1, n), np.float32)
    Crhs = np.array([float(C)], np.float32)
    Blhs = np.concatenate([-np.eye(n), np.eye(n)], axis=0).astype(np.float32)
    Brhs = np.concatenate([np.zeros(n), np.ones(n)]).astype(np.float32)
    FIlhs1 = fair
    FIrhs1 = np.array([C * n_male / n + 1.0], np.float32)
    FIlhs2 = -fair
    FIrhs2 = np.array([-(C * n_male / n)], np.float32)
    G = np.concatenate([Clhs, Blhs, FIlhs1, FIlhs2], axis=0)   # (2n+3, n)
    h = np.concatenate([Crhs, Brhs, FIrhs1, FIrhs2], axis=0)   # (2n+3,)
    return G, h


def cap_layer_lp_forward(x, G, h, eps):
    """x: (nBatch, n) float32 -> QP solution z: (nBatch, n) float32."""
    x = jnp.asarray(x, jnp.float32)
    nbatch, n = x.shape
    if nbatch > 1:
        print('Warning: nonunit batch encountered in CapLayerLP forward pass')
    m = G.shape[0]
    npad = _round_up(n, 128)
    mpad = _round_up(m, 128)
    bpad = max(_round_up(nbatch, BTILE), BTILE)

    # Zero-padded constraint matrix; padded rows get h=1 so 0 <= 1 is trivially
    # satisfied and their multipliers stay at 0; padded columns keep z = 0.
    Gp = np.zeros((mpad, npad), np.float64)
    Gp[:m, :n] = np.asarray(G, np.float64)
    hp = np.ones((mpad,), np.float64)
    hp[:m] = np.asarray(h, np.float64)

    # Diagonal (Pock-Chambolle) preconditioners, folded into the constants.
    row_abs = np.abs(Gp).sum(axis=1)
    col_abs = np.abs(Gp).sum(axis=0)
    sig = np.where(row_abs > 0, 1.0 / np.maximum(row_abs, 1e-12), 1.0)
    tau = np.where(col_abs > 0, 1.0 / np.maximum(col_abs, 1e-12), 1.0)
    den = 1.0 / (1.0 + tau * eps)
    taud = tau * den

    Gs = Gp * taud[None, :]                    # (mpad, npad) col-scaled G
    GTs = Gp.T * sig[None, :]                  # (npad, mpad) col-scaled G^T
    GTsd = den[:, None] * GTs                  # (npad, mpad) diag(den) @ GTs
    M = Gs @ GTs                               # (mpad, mpad) fused operator
    sigh = (sig * hp).reshape(1, mpad)
    den2 = den.reshape(1, npad)
    invsig = np.where(row_abs > 0, row_abs, 1.0).reshape(1, mpad)

    # taupd = tau * p * den with p = -x; zero rows for batch padding are inert.
    taupd = jnp.zeros((bpad, npad), jnp.float32)
    taupd = taupd.at[:nbatch, :n].set(-x * jnp.asarray(taud[:n], jnp.float32))
    # Constant offset of the dual recurrence: c = taupd @ GTs.
    cvec = jnp.dot(taupd, jnp.asarray(GTs, jnp.float32))

    max_iters = MAX_CHUNKS * CHUNK_ITERS
    cost = pl.CostEstimate(
        flops=2 * bpad * mpad * (mpad + 2 * npad) * max_iters,
        transcendentals=0,
        bytes_accessed=4 * (2 * bpad * npad + 2 * bpad * mpad
                            + mpad * mpad + 2 * mpad * npad + 2 * mpad + npad),
    )

    z_pad = pl.pallas_call(
        _qp_pdhg_dual_kernel,
        out_shape=jax.ShapeDtypeStruct((bpad, npad), jnp.float32),
        grid=(bpad // BTILE,),
        in_specs=[
            pl.BlockSpec((BTILE, npad), lambda b: (b, 0)),   # taupd
            pl.BlockSpec((BTILE, mpad), lambda b: (b, 0)),   # c
            pl.BlockSpec((mpad, mpad), lambda b: (0, 0)),    # M
            pl.BlockSpec((npad, mpad), lambda b: (0, 0)),    # GTsd
            pl.BlockSpec((mpad, npad), lambda b: (0, 0)),    # Gs
            pl.BlockSpec((1, mpad), lambda b: (0, 0)),       # sig*h
            pl.BlockSpec((1, npad), lambda b: (0, 0)),       # den
            pl.BlockSpec((1, mpad), lambda b: (0, 0)),       # 1/sig
        ],
        out_specs=pl.BlockSpec((BTILE, npad), lambda b: (b, 0)),
        compiler_params=pltpu.CompilerParams(
            dimension_semantics=("parallel",)),
        cost_estimate=cost,
    )(taupd, cvec,
      jnp.asarray(M, jnp.float32), jnp.asarray(GTsd, jnp.float32),
      jnp.asarray(Gs, jnp.float32), jnp.asarray(sigh, jnp.float32),
      jnp.asarray(den2, jnp.float32), jnp.asarray(invsig, jnp.float32))
    return z_pad[:nbatch, :n]


if __name__ == "__main__":
    n_features = 16
    C = 10
    eps = 1e-4
    # deterministic "male" indicator: every other feature -> N_male = 8
    indices_male = (np.arange(n_features) % 2 == 0).astype(np.float32)

    G, h = build_caplayer_lp_constraints(n_features, C, indices_male)

    key = jax.random.PRNGKey(0)
    x = jax.random.normal(key, (1, n_features), dtype=jnp.float32)

    z = cap_layer_lp_forward(x, G, h, eps)
    z = jax.block_until_ready(z)

    assert z.shape == (1, n_features)
    assert bool(jnp.all(jnp.isfinite(z)))
    # light feasibility sanity check on G z <= h (generous tolerance)
    viol = float(np.max(np.asarray(z, np.float64) @ G.T - h))
    assert viol < 5e-2, f"constraint violation too large: {viol}"
    print("KERNEL_OK")
</pallas_src>

<mosaic_0001>
module attributes {stable_mosaic.version = 11 : i64} {
  func.func @_qp_pdhg_dual_kernel(%arg0: i32, %arg1: memref<8x128xf32, #tpu.memory_space<vmem>>, %arg2: memref<8x128xf32, #tpu.memory_space<vmem>>, %arg3: memref<128x128xf32, #tpu.memory_space<vmem>>, %arg4: memref<128x128xf32, #tpu.memory_space<vmem>>, %arg5: memref<128x128xf32, #tpu.memory_space<vmem>>, %arg6: memref<1x128xf32, #tpu.memory_space<vmem>>, %arg7: memref<1x128xf32, #tpu.memory_space<vmem>>, %arg8: memref<1x128xf32, #tpu.memory_space<vmem>>, %arg9: memref<8x128xf32, #tpu.memory_space<vmem>>) attributes {dimension_semantics = [#tpu.dimension_semantics<parallel>], iteration_bounds = array<i64: 1>, scalar_prefetch = 0 : i64, scratch_operands = 0 : i64, tpu.core_type = #tpu.core_type<tc>, window_params = [{transform_indices = @transform_0, window_bounds = array<i64: 8, 128>}, {transform_indices = @transform_1, window_bounds = array<i64: 8, 128>}, {pipeline_mode = #tpu.pipeline_mode<synchronous>, transform_indices = @transform_2, window_bounds = array<i64: 128, 128>}, {pipeline_mode = #tpu.pipeline_mode<synchronous>, transform_indices = @transform_3, window_bounds = array<i64: 128, 128>}, {pipeline_mode = #tpu.pipeline_mode<synchronous>, transform_indices = @transform_4, window_bounds = array<i64: 128, 128>}, {pipeline_mode = #tpu.pipeline_mode<synchronous>, transform_indices = @transform_5, window_bounds = array<i64: 1, 128>}, {pipeline_mode = #tpu.pipeline_mode<synchronous>, transform_indices = @transform_6, window_bounds = array<i64: 1, 128>}, {pipeline_mode = #tpu.pipeline_mode<synchronous>, transform_indices = @transform_7, window_bounds = array<i64: 1, 128>}, {transform_indices = @transform_8, window_bounds = array<i64: 8, 128>}]} {
    %c0 = arith.constant 0 : index
    %c0_0 = arith.constant 0 : index
    %0 = vector.load %arg1[%c0, %c0_0] : memref<8x128xf32, #tpu.memory_space<vmem>>, vector<8x128xf32>
    %c0_1 = arith.constant 0 : index
    %c0_2 = arith.constant 0 : index
    %1 = vector.load %arg2[%c0_1, %c0_2] : memref<8x128xf32, #tpu.memory_space<vmem>>, vector<8x128xf32>
    %c0_3 = arith.constant 0 : index
    %c0_4 = arith.constant 0 : index
    %2 = vector.load %arg6[%c0_3, %c0_4] : memref<1x128xf32, #tpu.memory_space<vmem>>, vector<1x128xf32>
    %3 = vector.shape_cast %2 : vector<1x128xf32> to vector<1x128xf32>
    %4 = vector.broadcast %3 : vector<1x128xf32> to vector<8x128xf32>
    %c0_5 = arith.constant 0 : index
    %c0_6 = arith.constant 0 : index
    %5 = vector.load %arg7[%c0_5, %c0_6] : memref<1x128xf32, #tpu.memory_space<vmem>>, vector<1x128xf32>
    %6 = vector.shape_cast %5 : vector<1x128xf32> to vector<1x128xf32>
    %7 = vector.broadcast %6 : vector<1x128xf32> to vector<8x128xf32>
    %c0_7 = arith.constant 0 : index
    %c0_8 = arith.constant 0 : index
    %8 = vector.load %arg8[%c0_7, %c0_8] : memref<1x128xf32, #tpu.memory_space<vmem>>, vector<1x128xf32>
    %9 = vector.shape_cast %8 : vector<1x128xf32> to vector<1x128xf32>
    %10 = vector.broadcast %9 : vector<1x128xf32> to vector<8x128xf32>
    %cst = arith.constant 0.000000e+00 : f32
    %11 = vector.broadcast %cst : f32 to vector<8x128xf32>
    %cst_9 = arith.constant 0.000000e+00 : f32
    %12 = vector.broadcast %cst_9 : f32 to vector<8x128xf32>
    %cst_10 = arith.constant 0.000000e+00 : f32
    %13 = vector.broadcast %cst_10 : f32 to vector<8x128xf32>
    %c0_i32 = arith.constant 0 : i32
    %false = arith.constant false
    %14:6 = scf.while (%arg10 = %11, %arg11 = %12, %arg12 = %13, %arg13 = %13, %arg14 = %c0_i32, %arg15 = %false) : (vector<8x128xf32>, vector<8x128xf32>, vector<8x128xf32>, vector<8x128xf32>, i32, i1) -> (vector<8x128xf32>, vector<8x128xf32>, vector<8x128xf32>, vector<8x128xf32>, i32, i1) {
      %c120_i32 = arith.constant 120 : i32
      %16 = arith.cmpi slt, %arg14, %c120_i32 : i32
      %true = arith.constant true
      %17 = arith.xori %arg15, %true : i1
      %18 = arith.andi %16, %17 : i1
      scf.condition(%18) %arg10, %arg11, %arg12, %arg13, %arg14, %arg15 : vector<8x128xf32>, vector<8x128xf32>, vector<8x128xf32>, vector<8x128xf32>, i32, i1
    } do {
    ^bb0(%arg10: vector<8x128xf32>, %arg11: vector<8x128xf32>, %arg12: vector<8x128xf32>, %arg13: vector<8x128xf32>, %arg14: i32, %arg15: i1):
      %c0_i32_13 = arith.constant 0 : i32
      %c32_i32 = arith.constant 32 : i32
      %16 = arith.addi %c0_i32_13, %c32_i32 : i32
      %c1_i32 = arith.constant 1 : i32
      %17:4 = scf.for %arg16 = %c0_i32_13 to %16 step %c1_i32 iter_args(%arg17 = %arg10, %arg18 = %arg11, %arg19 = %arg12, %arg20 = %arg13) -> (vector<8x128xf32>, vector<8x128xf32>, vector<8x128xf32>, vector<8x128xf32>)  : i32 {
        %cst_23 = arith.constant 2.000000e+00 : f32
        %43 = vector.broadcast %cst_23 : f32 to vector<8x128xf32>
        %44 = arith.mulf %43, %arg19 : vector<8x128xf32>
        %45 = arith.addf %arg18, %44 : vector<8x128xf32>
        %46 = arith.subf %45, %arg20 : vector<8x128xf32>
        %47 = arith.subf %46, %4 : vector<8x128xf32>
        %cst_24 = arith.constant 0.000000e+00 : f32
        %48 = vector.broadcast %cst_24 : f32 to vector<8x128xf32>
        %49 = arith.maximumf %47, %48 : vector<8x128xf32>
        %50 = arith.mulf %arg17, %7 : vector<8x128xf32>
        %c0_25 = arith.constant 0 : index
        %c0_26 = arith.constant 0 : index
        %51 = vector.load %arg5[%c0_25, %c0_26] : memref<128x128xf32, #tpu.memory_space<vmem>>, vector<128x128xf32>
        %cst_27 = arith.constant dense<0.000000e+00> : vector<8x128xf32>
        %52 = tpu.matmul %49, %51, %cst_27 {dimension_numbers = #tpu.dot_dimension_numbers<[1], [0], [0], [1], [0, 0, 1, 1], [], []>} : vector<8x128xf32>, vector<128x128xf32>, vector<8x128xf32> -> vector<8x128xf32>
        %53 = arith.subf %50, %52 : vector<8x128xf32>
        %54 = arith.subf %53, %0 : vector<8x128xf32>
        %c0_28 = arith.constant 0 : index
        %c0_29 = arith.constant 0 : index
        %55 = vector.load %arg4[%c0_28, %c0_29] : memref<128x128xf32, #tpu.memory_space<vmem>>, vector<128x128xf32>
        %cst_30 = arith.constant dense<0.000000e+00> : vector<8x128xf32>
        %56 = tpu.matmul %arg17, %55, %cst_30 {dimension_numbers = #tpu.dot_dimension_numbers<[1], [0], [0], [1], [0, 0, 1, 1], [], []>} : vector<8x128xf32>, vector<128x128xf32>, vector<8x128xf32> -> vector<8x128xf32>
        %c0_31 = arith.constant 0 : index
        %c0_32 = arith.constant 0 : index
        %57 = vector.load %arg3[%c0_31, %c0_32] : memref<128x128xf32, #tpu.memory_space<vmem>>, vector<128x128xf32>
        %cst_33 = arith.constant dense<0.000000e+00> : vector<8x128xf32>
        %58 = tpu.matmul %49, %57, %cst_33 {dimension_numbers = #tpu.dot_dimension_numbers<[1], [0], [0], [1], [0, 0, 1, 1], [], []>} : vector<8x128xf32>, vector<128x128xf32>, vector<8x128xf32> -> vector<8x128xf32>
        %59 = arith.subf %56, %58 : vector<8x128xf32>
        %60 = arith.subf %59, %1 : vector<8x128xf32>
        %cst_34 = arith.constant 2.000000e+00 : f32
        %61 = vector.broadcast %cst_34 : f32 to vector<8x128xf32>
        %62 = arith.mulf %61, %60 : vector<8x128xf32>
        %63 = arith.addf %49, %62 : vector<8x128xf32>
        %64 = arith.subf %63, %arg19 : vector<8x128xf32>
        %65 = arith.subf %64, %4 : vector<8x128xf32>
        %cst_35 = arith.constant 0.000000e+00 : f32
        %66 = vector.broadcast %cst_35 : f32 to vector<8x128xf32>
        %67 = arith.maximumf %65, %66 : vector<8x128xf32>
        %68 = arith.mulf %54, %7 : vector<8x128xf32>
        %c0_36 = arith.constant 0 : index
        %c0_37 = arith.constant 0 : index
        %69 = vector.load %arg5[%c0_36, %c0_37] : memref<128x128xf32, #tpu.memory_space<vmem>>, vector<128x128xf32>
        %cst_38 = arith.constant dense<0.000000e+00> : vector<8x128xf32>
        %70 = tpu.matmul %67, %69, %cst_38 {dimension_numbers = #tpu.dot_dimension_numbers<[1], [0], [0], [1], [0, 0, 1, 1], [], []>} : vector<8x128xf32>, vector<128x128xf32>, vector<8x128xf32> -> vector<8x128xf32>
        %71 = arith.subf %68, %70 : vector<8x128xf32>
        %72 = arith.subf %71, %0 : vector<8x128xf32>
        %c0_39 = arith.constant 0 : index
        %c0_40 = arith.constant 0 : index
        %73 = vector.load %arg4[%c0_39, %c0_40] : memref<128x128xf32, #tpu.memory_space<vmem>>, vector<128x128xf32>
        %cst_41 = arith.constant dense<0.000000e+00> : vector<8x128xf32>
        %74 = tpu.matmul %54, %73, %cst_41 {dimension_numbers = #tpu.dot_dimension_numbers<[1], [0], [0], [1], [0, 0, 1, 1], [], []>} : vector<8x128xf32>, vector<128x128xf32>, vector<8x128xf32> -> vector<8x128xf32>
        %c0_42 = arith.constant 0 : index
        %c0_43 = arith.constant 0 : index
        %75 = vector.load %arg3[%c0_42, %c0_43] : memref<128x128xf32, #tpu.memory_space<vmem>>, vector<128x128xf32>
        %cst_44 = arith.constant dense<0.000000e+00> : vector<8x128xf32>
        %76 = tpu.matmul %67, %75, %cst_44 {dimension_numbers = #tpu.dot_dimension_numbers<[1], [0], [0], [1], [0, 0, 1, 1], [], []>} : vector<8x128xf32>, vector<128x128xf32>, vector<8x128xf32> -> vector<8x128xf32>
        %77 = arith.subf %74, %76 : vector<8x128xf32>
        %78 = arith.subf %77, %1 : vector<8x128xf32>
        %cst_45 = arith.constant 2.000000e+00 : f32
        %79 = vector.broadcast %cst_45 : f32 to vector<8x128xf32>
        %80 = arith.mulf %79, %78 : vector<8x128xf32>
        %81 = arith.addf %67, %80 : vector<8x128xf32>
        %82 = arith.subf %81, %60 : vector<8x128xf32>
        %83 = arith.subf %82, %4 : vector<8x128xf32>
        %cst_46 = arith.constant 0.000000e+00 : f32
        %84 = vector.broadcast %cst_46 : f32 to vector<8x128xf32>
        %85 = arith.maximumf %83, %84 : vector<8x128xf32>
        %86 = arith.mulf %72, %7 : vector<8x128xf32>
        %c0_47 = arith.constant 0 : index
        %c0_48 = arith.constant 0 : index
        %87 = vector.load %arg5[%c0_47, %c0_48] : memref<128x128xf32, #tpu.memory_space<vmem>>, vector<128x128xf32>
        %cst_49 = arith.constant dense<0.000000e+00> : vector<8x128xf32>
        %88 = tpu.matmul %85, %87, %cst_49 {dimension_numbers = #tpu.dot_dimension_numbers<[1], [0], [0], [1], [0, 0, 1, 1], [], []>} : vector<8x128xf32>, vector<128x128xf32>, vector<8x128xf32> -> vector<8x128xf32>
        %89 = arith.subf %86, %88 : vector<8x128xf32>
        %90 = arith.subf %89, %0 : vector<8x128xf32>
        %c0_50 = arith.constant 0 : index
        %c0_51 = arith.constant 0 : index
        %91 = vector.load %arg4[%c0_50, %c0_51] : memref<128x128xf32, #tpu.memory_space<vmem>>, vector<128x128xf32>
        %cst_52 = arith.constant dense<0.000000e+00> : vector<8x128xf32>
        %92 = tpu.matmul %72, %91, %cst_52 {dimension_numbers = #tpu.dot_dimension_numbers<[1], [0], [0], [1], [0, 0, 1, 1], [], []>} : vector<8x128xf32>, vector<128x128xf32>, vector<8x128xf32> -> vector<8x128xf32>
        %c0_53 = arith.constant 0 : index
        %c0_54 = arith.constant 0 : index
        %93 = vector.load %arg3[%c0_53, %c0_54] : memref<128x128xf32, #tpu.memory_space<vmem>>, vector<128x128xf32>
        %cst_55 = arith.constant dense<0.000000e+00> : vector<8x128xf32>
        %94 = tpu.matmul %85, %93, %cst_55 {dimension_numbers = #tpu.dot_dimension_numbers<[1], [0], [0], [1], [0, 0, 1, 1], [], []>} : vector<8x128xf32>, vector<128x128xf32>, vector<8x128xf32> -> vector<8x128xf32>
        %95 = arith.subf %92, %94 : vector<8x128xf32>
        %96 = arith.subf %95, %1 : vector<8x128xf32>
        %cst_56 = arith.constant 2.000000e+00 : f32
        %97 = vector.broadcast %cst_56 : f32 to vector<8x128xf32>
        %98 = arith.mulf %97, %96 : vector<8x128xf32>
        %99 = arith.addf %85, %98 : vector<8x128xf32>
        %100 = arith.subf %99, %78 : vector<8x128xf32>
        %101 = arith.subf %100, %4 : vector<8x128xf32>
        %cst_57 = arith.constant 0.000000e+00 : f32
        %102 = vector.broadcast %cst_57 : f32 to vector<8x128xf32>
        %103 = arith.maximumf %101, %102 : vector<8x128xf32>
        %104 = arith.mulf %90, %7 : vector<8x128xf32>
        %c0_58 = arith.constant 0 : index
        %c0_59 = arith.constant 0 : index
        %105 = vector.load %arg5[%c0_58, %c0_59] : memref<128x128xf32, #tpu.memory_space<vmem>>, vector<128x128xf32>
        %cst_60 = arith.constant dense<0.000000e+00> : vector<8x128xf32>
        %106 = tpu.matmul %103, %105, %cst_60 {dimension_numbers = #tpu.dot_dimension_numbers<[1], [0], [0], [1], [0, 0, 1, 1], [], []>} : vector<8x128xf32>, vector<128x128xf32>, vector<8x128xf32> -> vector<8x128xf32>
        %107 = arith.subf %104, %106 : vector<8x128xf32>
        %108 = arith.subf %107, %0 : vector<8x128xf32>
        %c0_61 = arith.constant 0 : index
        %c0_62 = arith.constant 0 : index
        %109 = vector.load %arg4[%c0_61, %c0_62] : memref<128x128xf32, #tpu.memory_space<vmem>>, vector<128x128xf32>
        %cst_63 = arith.constant dense<0.000000e+00> : vector<8x128xf32>
        %110 = tpu.matmul %90, %109, %cst_63 {dimension_numbers = #tpu.dot_dimension_numbers<[1], [0], [0], [1], [0, 0, 1, 1], [], []>} : vector<8x128xf32>, vector<128x128xf32>, vector<8x128xf32> -> vector<8x128xf32>
        %c0_64 = arith.constant 0 : index
        %c0_65 = arith.constant 0 : index
        %111 = vector.load %arg3[%c0_64, %c0_65] : memref<128x128xf32, #tpu.memory_space<vmem>>, vector<128x128xf32>
        %cst_66 = arith.constant dense<0.000000e+00> : vector<8x128xf32>
        %112 = tpu.matmul %103, %111, %cst_66 {dimension_numbers = #tpu.dot_dimension_numbers<[1], [0], [0], [1], [0, 0, 1, 1], [], []>} : vector<8x128xf32>, vector<128x128xf32>, vector<8x128xf32> -> vector<8x128xf32>
        %113 = arith.subf %110, %112 : vector<8x128xf32>
        %114 = arith.subf %113, %1 : vector<8x128xf32>
        scf.yield %108, %103, %114, %96 : vector<8x128xf32>, vector<8x128xf32>, vector<8x128xf32>, vector<8x128xf32>
      }
      %c32_i32_14 = arith.constant 32 : i32
      %18 = arith.subf %17#0, %arg10 : vector<8x128xf32>
      %19 = math.absf %18 : vector<8x128xf32>
      %20 = vector.shape_cast %19 : vector<8x128xf32> to vector<1x8x128xf32>
      %cst_15 = arith.constant dense<0xFF800000> : vector<1xf32>
      %21 = vector.multi_reduction <maximumf>, %20, %cst_15 [1, 2] : vector<1x8x128xf32> to vector<1xf32>
      %22 = vector.shape_cast %21 : vector<1xf32> to vector<1x1x1xf32>
      %23 = vector.extract %22[0, 0, 0] : f32 from vector<1x1x1xf32>
      %24 = math.absf %17#0 : vector<8x128xf32>
      %25 = vector.shape_cast %24 : vector<8x128xf32> to vector<1x8x128xf32>
      %cst_16 = arith.constant dense<0xFF800000> : vector<1xf32>
      %26 = vector.multi_reduction <maximumf>, %25, %cst_16 [1, 2] : vector<1x8x128xf32> to vector<1xf32>
      %27 = vector.shape_cast %26 : vector<1xf32> to vector<1x1x1xf32>
      %28 = vector.extract %27[0, 0, 0] : f32 from vector<1x1x1xf32>
      %cst_17 = arith.constant 1.000000e+00 : f32
      %29 = arith.maximumf %cst_17, %28 : f32
      %30 = arith.subf %17#2, %4 : vector<8x128xf32>
      %31 = arith.mulf %30, %10 : vector<8x128xf32>
      %cst_18 = arith.constant 0.000000e+00 : f32
      %32 = vector.broadcast %cst_18 : f32 to vector<8x128xf32>
      %33 = arith.maximumf %31, %32 : vector<8x128xf32>
      %34 = vector.shape_cast %33 : vector<8x128xf32> to vector<1x8x128xf32>
      %cst_19 = arith.constant dense<0xFF800000> : vector<1xf32>
      %35 = vector.multi_reduction <maximumf>, %34, %cst_19 [1, 2] : vector<1x8x128xf32> to vector<1xf32>
      %36 = vector.shape_cast %35 : vector<1xf32> to vector<1x1x1xf32>
      %37 = vector.extract %36[0, 0, 0] : f32 from vector<1x1x1xf32>
      %cst_20 = arith.constant 9.99999974E-5 : f32
      %38 = arith.mulf %cst_20, %29 : f32
      %39 = arith.cmpf olt, %23, %38 : f32
      %cst_21 = arith.constant 0.00999999977 : f32
      %40 = arith.cmpf olt, %37, %cst_21 : f32
      %41 = arith.andi %39, %40 : i1
      %c1_i32_22 = arith.constant 1 : i32
      %42 = arith.addi %arg14, %c1_i32_22 : i32
      scf.yield %17#0, %17#1, %17#2, %17#3, %42, %41 : vector<8x128xf32>, vector<8x128xf32>, vector<8x128xf32>, vector<8x128xf32>, i32, i1
    }
    %c0_11 = arith.constant 0 : index
    %c0_12 = arith.constant 0 : index
    %15 = vector.load %arg9[%c0_11, %c0_12] : memref<8x128xf32, #tpu.memory_space<vmem>>, vector<8x128xf32>
    tpu.vector_store %arg9[%c0_11, %c0_12], %14#0 {strides = array<i32>} : memref<8x128xf32, #tpu.memory_space<vmem>>, vector<8x128xf32>,
    return
  }
  func.func @transform_0(%arg0: i32) -> (i32, i32) {
    %c0_i32 = arith.constant 0 : i32
    %c0_i32_0 = arith.constant 0 : i32
    return %arg0, %c0_i32 : i32, i32
  }
  func.func @transform_1(%arg0: i32) -> (i32, i32) {
    %c0_i32 = arith.constant 0 : i32
    %c0_i32_0 = arith.constant 0 : i32
    return %arg0, %c0_i32 : i32, i32
  }
  func.func @transform_2(%arg0: i32) -> (i32, i32) {
    %c0_i32 = arith.constant 0 : i32
    %c0_i32_0 = arith.constant 0 : i32
    %c0_i32_1 = arith.constant 0 : i32
    return %c0_i32, %c0_i32_0 : i32, i32
  }
  func.func @transform_3(%arg0: i32) -> (i32, i32) {
    %c0_i32 = arith.constant 0 : i32
    %c0_i32_0 = arith.constant 0 : i32
    %c0_i32_1 = arith.constant 0 : i32
    return %c0_i32, %c0_i32_0 : i32, i32
  }
  func.func @transform_4(%arg0: i32) -> (i32, i32) {
    %c0_i32 = arith.constant 0 : i32
    %c0_i32_0 = arith.constant 0 : i32
    %c0_i32_1 = arith.constant 0 : i32
    return %c0_i32, %c0_i32_0 : i32, i32
  }
  func.func @transform_5(%arg0: i32) -> (i32, i32) {
    %c0_i32 = arith.constant 0 : i32
    %c0_i32_0 = arith.constant 0 : i32
    %c0_i32_1 = arith.constant 0 : i32
    return %c0_i32, %c0_i32_0 : i32, i32
  }
  func.func @transform_6(%arg0: i32) -> (i32, i32) {
    %c0_i32 = arith.constant 0 : i32
    %c0_i32_0 = arith.constant 0 : i32
    %c0_i32_1 = arith.constant 0 : i32
    return %c0_i32, %c0_i32_0 : i32, i32
  }
  func.func @transform_7(%arg0: i32) -> (i32, i32) {
    %c0_i32 = arith.constant 0 : i32
    %c0_i32_0 = arith.constant 0 : i32
    %c0_i32_1 = arith.constant 0 : i32
    return %c0_i32, %c0_i32_0 : i32, i32
  }
  func.func @transform_8(%arg0: i32) -> (i32, i32) {
    %c0_i32 = arith.constant 0 : i32
    %c0_i32_0 = arith.constant 0 : i32
    return %arg0, %c0_i32 : i32, i32
  }
}

</mosaic_0001>

<llo_original>
// kernel: tpu_custom_call.1
$region0: #{tpu_custom_call.1}
  #allocation0 [shape = 'u32[]', space=smem, size = 0x4, offset = 0x4, fixed_abs, tag = 'smem constant byte address 0x4 - core index']
  #allocation1 [shape = 'u32[144,128]{1,0:T(1,128)}', space=vmem, size = 0x12000, scoped, tag = 'internal scratch']
  %s0 = inlined_call_operand.hbm [shape: f32[8,128], index: 0, kind: input, shape index: {}]
  %s1 = inlined_call_operand.hbm [shape: f32[8,128], index: 1, kind: input, shape index: {}]
  %s2 = inlined_call_operand.hbm [shape: f32[128,128], index: 2, kind: input, shape index: {}]
  %s3 = inlined_call_operand.hbm [shape: f32[128,128], index: 3, kind: input, shape index: {}]
  %s4 = inlined_call_operand.hbm [shape: f32[128,128], index: 4, kind: input, shape index: {}]
  %s5 = inlined_call_operand.vmem [shape: f32[1,128], index: 5, kind: input, shape index: {}]
  %s6 = inlined_call_operand.vmem [shape: f32[1,128], index: 6, kind: input, shape index: {}]
  %s7 = inlined_call_operand.vmem [shape: f32[1,128], index: 7, kind: input, shape index: {}]
  %s8 = inlined_call_operand.hbm [shape: f32[8,128], index: 8, kind: output, shape index: {}]
  %s9 = sld [smem:[#allocation0]]
  $region76: #{tpu_custom_call.1} parent=0
    _
  %s11 = ssub.s32 1, %s9
  %s12 = scalar_select 0, %s11, %s9
  $region1: #{tpu_custom_call.1} parent=0
    #allocation2 [shape = 'u8[4096]{0}', space=vmem, size = 0x1000, scoped, tag = 'input window, operand 0, single buffered']
    #allocation3 [shape = 's32[1]{0}', space=sflag, size = 0x4, scoped, tag = 'scoped memory for tpu_custom_call.1']
    #allocation4 [shape = 's32[1]{0}', space=sflag, size = 0x4, scoped, tag = 'scoped memory for tpu_custom_call.1']
    #allocation5 [shape = 'u8[4096]{0}', space=vmem, size = 0x1000, scoped, tag = 'input window, operand 1, single buffered']
    #allocation6 [shape = 's32[1]{0}', space=sflag, size = 0x4, scoped, tag = 'scoped memory for tpu_custom_call.1']
    #allocation7 [shape = 'u8[65536]{0}', space=vmem, size = 0x10000, scoped, tag = 'input window, operand 2, single buffered']
    #allocation8 [shape = 'u8[65536]{0}', space=vmem, size = 0x10000, scoped, tag = 'input window, operand 3, single buffered']
    #allocation9 [shape = 's32[1]{0}', space=sflag, size = 0x4, scoped, tag = 'scoped memory for tpu_custom_call.1']
    #allocation10 [shape = 'u8[65536]{0}', space=vmem, size = 0x10000, scoped, tag = 'input window, operand 4, single buffered']
    #allocation11 [shape = 'u8[4096]{0}', space=vmem, size = 0x1000, scoped, tag = 'output window, operand 0, single buffered']
    %13 = vsyncpa [#allocation3], 0
    %14 = vsyncpa [#allocation6], 0
    %15 = vsyncpa [#allocation9], 0
    %16 = vsyncpa [#allocation4], 0
    // Predicated region
    $region2: #{tpu_custom_call.1} parent=1 // pred_check
      _
    $region3: #{tpu_custom_call.1} parent=1 // pred_check_branch
      %18 = sbr.rel (0) target = $region5
    $region4: #{tpu_custom_call.1} parent=1 // pred_region
      %s20 = ssub.s32 128, 128
      %21 = vsyncadd [#allocation3], %s20
      %s23 = sshll.u32 [#allocation2], 4
      %s24 = int_to_ptr.vmem [resolvable:$true] %s23
      %26 = dma.hbm_to_vmem [thread:$0]  %s0, 128, %s24, [#allocation3]
    $region5: #{tpu_custom_call.1} parent=1 // pred_fallthru
      _
    // Predicated region
    $region6: #{tpu_custom_call.1} parent=1 // pred_check
      _
    $region7: #{tpu_custom_call.1} parent=1 // pred_check_branch
      %28 = sbr.rel (0) target = $region9
    $region8: #{tpu_custom_call.1} parent=1 // pred_region
      %s30 = ssub.s32 128, 128
      %31 = vsyncadd [#allocation6], %s30
      %s33 = sshll.u32 [#allocation5], 4
      %s34 = int_to_ptr.vmem [resolvable:$true] %s33
      %36 = dma.hbm_to_vmem [thread:$0]  %s1, 128, %s34, [#allocation6]
    $region9: #{tpu_custom_call.1} parent=1 // pred_fallthru
      _
    // Predicated region
    $region10: #{tpu_custom_call.1} parent=1 // pred_check
      _
    $region11: #{tpu_custom_call.1} parent=1 // pred_check_branch
      %38 = sbr.rel (0) target = $region13
    $region12: #{tpu_custom_call.1} parent=1 // pred_region
      %s40 = ssub.s32 2048, 2048
      %41 = vsyncadd [#allocation6], %s40
      %s42 = sshll.u32 [#allocation7], 4
      %s43 = int_to_ptr.vmem [resolvable:$true] %s42
      %48 = dma.hbm_to_vmem [thread:$0]  %s2, 2048, %s43, [#allocation6], 128, 128, 8
    $region13: #{tpu_custom_call.1} parent=1 // pred_fallthru
      _
    // Predicated region
    $region14: #{tpu_custom_call.1} parent=1 // pred_check
      _
    $region15: #{tpu_custom_call.1} parent=1 // pred_check_branch
      %50 = sbr.rel (0) target = $region17
    $region16: #{tpu_custom_call.1} parent=1 // pred_region
      %s52 = ssub.s32 2048, 2048
      %53 = vsyncadd [#allocation9], %s52
      %s54 = sshll.u32 [#allocation8], 4
      %s55 = int_to_ptr.vmem [resolvable:$true] %s54
      %60 = dma.hbm_to_vmem [thread:$0]  %s3, 2048, %s55, [#allocation9], 128, 128, 8
    $region17: #{tpu_custom_call.1} parent=1 // pred_fallthru
      _
    // Predicated region
    $region18: #{tpu_custom_call.1} parent=1 // pred_check
      _
    $region19: #{tpu_custom_call.1} parent=1 // pred_check_branch
      %62 = sbr.rel (0) target = $region21
    $region20: #{tpu_custom_call.1} parent=1 // pred_region
      %s64 = ssub.s32 2048, 2048
      %65 = vsyncadd [#allocation9], %s64
      %s66 = sshll.u32 [#allocation10], 4
      %s67 = int_to_ptr.vmem [resolvable:$true] %s66
      %72 = dma.hbm_to_vmem [thread:$0]  %s4, 2048, %s67, [#allocation9], 128, 128, 8
    $region21: #{tpu_custom_call.1} parent=1 // pred_fallthru
      _
    // Predicated region
    $region22: #{tpu_custom_call.1} parent=1 // pred_check
      _
    $region23: #{tpu_custom_call.1} parent=1 // pred_check_branch
      %74 = sbr.rel (0) target = $region25
    $region24: #{tpu_custom_call.1} parent=1 // pred_region
      _
    $region25: #{tpu_custom_call.1} parent=1 // pred_fallthru
      _
    // Predicated region
    $region26: #{tpu_custom_call.1} parent=1 // pred_check
      _
    $region27: #{tpu_custom_call.1} parent=1 // pred_check_branch
      %76 = sbr.rel (0) target = $region29
    $region28: #{tpu_custom_call.1} parent=1 // pred_region
      _
    $region29: #{tpu_custom_call.1} parent=1 // pred_fallthru
      _
    // Predicated region
    $region30: #{tpu_custom_call.1} parent=1 // pred_check
      _
    $region31: #{tpu_custom_call.1} parent=1 // pred_check_branch
      %78 = sbr.rel (0) target = $region33
    $region32: #{tpu_custom_call.1} parent=1 // pred_region
      _
    $region33: #{tpu_custom_call.1} parent=1 // pred_fallthru
      _
    // Predicated region
    $region34: #{tpu_custom_call.1} parent=1 // pred_check
      _
    $region35: #{tpu_custom_call.1} parent=1 // pred_check_branch
      %80 = sbr.rel (0) target = $region37
    $region36: #{tpu_custom_call.1} parent=1 // pred_region
      %81 = dma.done [#allocation3], 128
    $region37: #{tpu_custom_call.1} parent=1 // pred_fallthru
      _
    // Predicated region
    $region38: #{tpu_custom_call.1} parent=1 // pred_check
      _
    $region39: #{tpu_custom_call.1} parent=1 // pred_check_branch
      %83 = sbr.rel (0) target = $region41
    $region40: #{tpu_custom_call.1} parent=1 // pred_region
      %84 = dma.done [#allocation6], 128
    $region41: #{tpu_custom_call.1} parent=1 // pred_fallthru
      _
    // Predicated region
    $region42: #{tpu_custom_call.1} parent=1 // pred_check
      _
    $region43: #{tpu_custom_call.1} parent=1 // pred_check_branch
      %86 = sbr.rel (0) target = $region45
    $region44: #{tpu_custom_call.1} parent=1 // pred_region
      %87 = dma.done [#allocation6], 2048
    $region45: #{tpu_custom_call.1} parent=1 // pred_fallthru
      _
    // Predicated region
    $region46: #{tpu_custom_call.1} parent=1 // pred_check
      _
    $region47: #{tpu_custom_call.1} parent=1 // pred_check_branch
      %89 = sbr.rel (0) target = $region49
    $region48: #{tpu_custom_call.1} parent=1 // pred_region
      %90 = dma.done [#allocation9], 2048
    $region49: #{tpu_custom_call.1} parent=1 // pred_fallthru
      _
    // Predicated region
    $region50: #{tpu_custom_call.1} parent=1 // pred_check
      _
    $region51: #{tpu_custom_call.1} parent=1 // pred_check_branch
      %92 = sbr.rel (0) target = $region53
    $region52: #{tpu_custom_call.1} parent=1 // pred_region
      %93 = dma.done [#allocation9], 2048
    $region53: #{tpu_custom_call.1} parent=1 // pred_fallthru
      _
    %v94 = vld [vmem:[#allocation2] sm:$0xff]
    %v95 = vld [vmem:[#allocation5] sm:$0xff]
    %v96 = vld [vmem:[%s5] sm:$0x1]
    %v98 = vlaneseq
    %v99 = vshrl.u32 %v98, 7
    %v100 = vsub.s32 0, %v99
    %v101 = vrot.slane %v96, %v100
    %v103 = vld [vmem:[%s6] sm:$0x1]
    %v105 = vlaneseq
    %v106 = vshrl.u32 %v105, 7
    %v107 = vsub.s32 0, %v106
    %v108 = vrot.slane %v103, %v107
    %v110 = vld [vmem:[%s7] sm:$0x1]
    %v112 = vlaneseq
    %v113 = vshrl.u32 %v112, 7
    %v114 = vsub.s32 0, %v113
    %v115 = vrot.slane %v110, %v114
    // While loop
    $region54: #{tpu_custom_call.1} parent=1 // loop_pre_header
      _
    $region55: #{tpu_custom_call.1} parent=1 // loop_header
      %v118 = vphi 0.0, %v136
      %v119 = vphi 0.0, %v137
      %v120 = vphi 0.0, %v138
      %v121 = vphi 0.0, %v139
      %s122 = sphi 0, %s1107
      %p123 = pphi 0, %p1106
      %p124 = scmp.lt.s32.totalorder %s122, 120
      %p125 = pneg %p123
      %p126 = pnand %p124, %p125
      %p127 = pneg %p126
    $region56: #{tpu_custom_call.1} parent=1 // loop_header_branch
      %129 = sbr.rel (%p126) target = $region60
    $region57: #{tpu_custom_call.1} parent=1 // loop_body
      loop: start=0, step=1, limit=32
      $region61: #{tpu_custom_call.1} parent=57 // loop_pre_header
        _
      $region62: #{tpu_custom_call.1} parent=57 // loop_header
        %s131 = sphi 0, %s135
        %p132 = scmp.ge.s32.totalorder %s131, 32
        %v136 = vphi %v118, %v925
        %v137 = vphi %v119, %v852
        %v138 = vphi %v120, %v1067
        %v139 = vphi %v121, %v847
      $region63: #{tpu_custom_call.1} parent=57 // loop_header_branch
        %134 = sbr.rel (%p132) target = $region67
      $region64: #{tpu_custom_call.1} parent=57 // loop_body
        %v140 = vmul.f32 %v138, 2.0
        %v141 = vadd.f32 %v137, %v140
        %v142 = vsub.f32 %v141, %v139
        %v143 = vsub.f32 %v142, %v101
        %v144 = vmax.f32 %v143, 0.0
        %v145 = vmul.f32 %v136, %v108
        %v146 = vld [vmem:[#allocation10] sm:$0xff]
        %v147 = vld [vmem:[#allocation10 + $0x8] sm:$0xff]
        %v148 = vld [vmem:[#allocation10 + $0x10] sm:$0xff]
        %v149 = vld [vmem:[#allocation10 + $0x18] sm:$0xff]
        %v150 = vld [vmem:[#allocation10 + $0x20] sm:$0xff]
        %v151 = vld [vmem:[#allocation10 + $0x28] sm:$0xff]
        %v152 = vld [vmem:[#allocation10 + $0x30] sm:$0xff]
        %v153 = vld [vmem:[#allocation10 + $0x38] sm:$0xff]
        %v154 = vld [vmem:[#allocation10 + $0x40] sm:$0xff]
        %v155 = vld [vmem:[#allocation10 + $0x48] sm:$0xff]
        %v156 = vld [vmem:[#allocation10 + $0x50] sm:$0xff]
        %v157 = vld [vmem:[#allocation10 + $0x58] sm:$0xff]
        %v158 = vld [vmem:[#allocation10 + $0x60] sm:$0xff]
        %v159 = vld [vmem:[#allocation10 + $0x68] sm:$0xff]
        %v160 = vld [vmem:[#allocation10 + $0x70] sm:$0xff]
        %v161 = vld [vmem:[#allocation10 + $0x78] sm:$0xff]
        %162 = vmatprep.subr.mxu0 0.0
        %163 = vmatpush1.msra.mxu0 %v146
        %164 = vmatprep.subr.mxu0 0.0
        %165 = vmatpush1.msra.mxu0 %v147
        %166 = vmatprep.subr.mxu0 0.0
        %167 = vmatpush1.msra.mxu0 %v148
        %168 = vmatprep.subr.mxu0 0.0
        %169 = vmatpush1.msra.mxu0 %v149
        %170 = vmatprep.subr.mxu0 0.0
        %171 = vmatpush1.msra.mxu0 %v150
        %172 = vmatprep.subr.mxu0 0.0
        %173 = vmatpush1.msra.mxu0 %v151
        %174 = vmatprep.subr.mxu0 0.0
        %175 = vmatpush1.msra.mxu0 %v152
        %176 = vmatprep.subr.mxu0 0.0
        %177 = vmatpush1.msra.mxu0 %v153
        %178 = vmatprep.subr.mxu0 0.0
        %179 = vmatpush1.msra.mxu0 %v154
        %180 = vmatprep.subr.mxu0 0.0
        %181 = vmatpush1.msra.mxu0 %v155
        %182 = vmatprep.subr.mxu0 0.0
        %183 = vmatpush1.msra.mxu0 %v156
        %184 = vmatprep.subr.mxu0 0.0
        %185 = vmatpush1.msra.mxu0 %v157
        %186 = vmatprep.subr.mxu0 0.0
        %187 = vmatpush1.msra.mxu0 %v158
        %188 = vmatprep.subr.mxu0 0.0
        %189 = vmatpush1.msra.mxu0 %v159
        %190 = vmatprep.subr.mxu0 0.0
        %191 = vmatpush1.msra.mxu0 %v160
        %192 = vmatprep.subr.mxu0 0.0
        %193 = vmatpush1.msra.mxu0 %v161
        %194 = vmatprep.subr.mxu0 0.0
        %195 = vmatpush1.msra.mxu0 0.0
        %196 = vmatprep.subr.mxu0 0.0
        %197 = vmatpush1.msra.mxu0 0.0
        %198 = vmatprep.subr.mxu0 0.0
        %199 = vmatpush1.msra.mxu0 0.0
        %200 = vmatprep.subr.mxu0 0.0
        %201 = vmatpush1.msra.mxu0 0.0
        %202 = vmatprep.subr.mxu0 0.0
        %203 = vmatpush1.msra.mxu0 0.0
        %204 = vmatprep.subr.mxu0 0.0
        %205 = vmatpush1.msra.mxu0 0.0
        %206 = vmatprep.subr.mxu0 0.0
        %207 = vmatpush1.msra.mxu0 0.0
        %208 = vmatprep.subr.mxu0 0.0
        %209 = vmatpush1.msra.mxu0 0.0
        %210 = vmatprep.subr.mxu0 0.0
        %211 = vmatpush1.msra.mxu0 0.0
        %212 = vmatprep.subr.mxu0 0.0
        %213 = vmatpush1.msra.mxu0 0.0
        %214 = vmatprep.subr.mxu0 0.0
        %215 = vmatpush1.msra.mxu0 0.0
        %216 = vmatprep.subr.mxu0 0.0
        %217 = vmatpush1.msra.mxu0 0.0
        %218 = vmatprep.subr.mxu0 0.0
        %219 = vmatpush1.msra.mxu0 0.0
        %220 = vmatprep.subr.mxu0 0.0
        %221 = vmatpush1.msra.mxu0 0.0
        %222 = vmatprep.subr.mxu0 0.0
        %223 = vmatpush1.msra.mxu0 0.0
        %224 = vmatprep.subr.mxu0 0.0
        %225 = vmatpush1.msra.mxu0 0.0
        %226 = vmatprep.mubr.f32.mxu0 0.0
        %227 = vmatmul.mubr.f32.gmra.mrb[0].mxu0 %v144
        %v228 = vpop.f32.mrb[0].mxu0
        %v229 = vadd.f32 0.0, %v228
        %v230 = vpop.f32.mrb[0].mxu0
        %231 = vdwg.mxu0
        %v232 = vsub.f32 %v145, %v229
        %v233 = vsub.f32 %v232, %v94
        %v234 = vld [vmem:[#allocation8] sm:$0xff]
        %v235 = vld [vmem:[#allocation8 + $0x8] sm:$0xff]
        %v236 = vld [vmem:[#allocation8 + $0x10] sm:$0xff]
        %v237 = vld [vmem:[#allocation8 + $0x18] sm:$0xff]
        %v238 = vld [vmem:[#allocation8 + $0x20] sm:$0xff]
        %v239 = vld [vmem:[#allocation8 + $0x28] sm:$0xff]
        %v240 = vld [vmem:[#allocation8 + $0x30] sm:$0xff]
        %v241 = vld [vmem:[#allocation8 + $0x38] sm:$0xff]
        %v242 = vld [vmem:[#allocation8 + $0x40] sm:$0xff]
        %v243 = vld [vmem:[#allocation8 + $0x48] sm:$0xff]
        %v244 = vld [vmem:[#allocation8 + $0x50] sm:$0xff]
        %v245 = vld [vmem:[#allocation8 + $0x58] sm:$0xff]
        %v246 = vld [vmem:[#allocation8 + $0x60] sm:$0xff]
        %v247 = vld [vmem:[#allocation8 + $0x68] sm:$0xff]
        %v248 = vld [vmem:[#allocation8 + $0x70] sm:$0xff]
        %v249 = vld [vmem:[#allocation8 + $0x78] sm:$0xff]
        %250 = vmatprep.subr.mxu0 0.0
        %251 = vmatpush1.msra.mxu0 %v234
        %252 = vmatprep.subr.mxu0 0.0
        %253 = vmatpush1.msra.mxu0 %v235
        %254 = vmatprep.subr.mxu0 0.0
        %255 = vmatpush1.msra.mxu0 %v236
        %256 = vmatprep.subr.mxu0 0.0
        %257 = vmatpush1.msra.mxu0 %v237
        %258 = vmatprep.subr.mxu0 0.0
        %259 = vmatpush1.msra.mxu0 %v238
        %260 = vmatprep.subr.mxu0 0.0
        %261 = vmatpush1.msra.mxu0 %v239
        %262 = vmatprep.subr.mxu0 0.0
        %263 = vmatpush1.msra.mxu0 %v240
        %264 = vmatprep.subr.mxu0 0.0
        %265 = vmatpush1.msra.mxu0 %v241
        %266 = vmatprep.subr.mxu0 0.0
        %267 = vmatpush1.msra.mxu0 %v242
        %268 = vmatprep.subr.mxu0 0.0
        %269 = vmatpush1.msra.mxu0 %v243
        %270 = vmatprep.subr.mxu0 0.0
        %271 = vmatpush1.msra.mxu0 %v244
        %272 = vmatprep.subr.mxu0 0.0
        %273 = vmatpush1.msra.mxu0 %v245
        %274 = vmatprep.subr.mxu0 0.0
        %275 = vmatpush1.msra.mxu0 %v246
        %276 = vmatprep.subr.mxu0 0.0
        %277 = vmatpush1.msra.mxu0 %v247
        %278 = vmatprep.subr.mxu0 0.0
        %279 = vmatpush1.msra.mxu0 %v248
        %280 = vmatprep.subr.mxu0 0.0
        %281 = vmatpush1.msra.mxu0 %v249
        %282 = vmatprep.subr.mxu0 0.0
        %283 = vmatpush1.msra.mxu0 0.0
        %284 = vmatprep.subr.mxu0 0.0
        %285 = vmatpush1.msra.mxu0 0.0
        %286 = vmatprep.subr.mxu0 0.0
        %287 = vmatpush1.msra.mxu0 0.0
        %288 = vmatprep.subr.mxu0 0.0
        %289 = vmatpush1.msra.mxu0 0.0
        %290 = vmatprep.subr.mxu0 0.0
        %291 = vmatpush1.msra.mxu0 0.0
        %292 = vmatprep.subr.mxu0 0.0
        %293 = vmatpush1.msra.mxu0 0.0
        %294 = vmatprep.subr.mxu0 0.0
        %295 = vmatpush1.msra.mxu0 0.0
        %296 = vmatprep.subr.mxu0 0.0
        %297 = vmatpush1.msra.mxu0 0.0
        %298 = vmatprep.subr.mxu0 0.0
        %299 = vmatpush1.msra.mxu0 0.0
        %300 = vmatprep.subr.mxu0 0.0
        %301 = vmatpush1.msra.mxu0 0.0
        %302 = vmatprep.subr.mxu0 0.0
        %303 = vmatpush1.msra.mxu0 0.0
        %304 = vmatprep.subr.mxu0 0.0
        %305 = vmatpush1.msra.mxu0 0.0
        %306 = vmatprep.subr.mxu0 0.0
        %307 = vmatpush1.msra.mxu0 0.0
        %308 = vmatprep.subr.mxu0 0.0
        %309 = vmatpush1.msra.mxu0 0.0
        %310 = vmatprep.subr.mxu0 0.0
        %311 = vmatpush1.msra.mxu0 0.0
        %312 = vmatprep.subr.mxu0 0.0
        %313 = vmatpush1.msra.mxu0 0.0
        %314 = vmatprep.mubr.f32.mxu0 0.0
        %315 = vmatmul.mubr.f32.gmra.mrb[0].mxu0 %v136
        %v316 = vpop.f32.mrb[0].mxu0
        %v317 = vadd.f32 0.0, %v316
        %v318 = vpop.f32.mrb[0].mxu0
        %319 = vdwg.mxu0
        %v320 = vld [vmem:[#allocation7] sm:$0xff]
        %v321 = vld [vmem:[#allocation7 + $0x8] sm:$0xff]
        %v322 = vld [vmem:[#allocation7 + $0x10] sm:$0xff]
        %v323 = vld [vmem:[#allocation7 + $0x18] sm:$0xff]
        %v324 = vld [vmem:[#allocation7 + $0x20] sm:$0xff]
        %v325 = vld [vmem:[#allocation7 + $0x28] sm:$0xff]
        %v326 = vld [vmem:[#allocation7 + $0x30] sm:$0xff]
        %v327 = vld [vmem:[#allocation7 + $0x38] sm:$0xff]
        %v328 = vld [vmem:[#allocation7 + $0x40] sm:$0xff]
        %v329 = vld [vmem:[#allocation7 + $0x48] sm:$0xff]
        %v330 = vld [vmem:[#allocation7 + $0x50] sm:$0xff]
        %v331 = vld [vmem:[#allocation7 + $0x58] sm:$0xff]
        %v332 = vld [vmem:[#allocation7 + $0x60] sm:$0xff]
        %v333 = vld [vmem:[#allocation7 + $0x68] sm:$0xff]
        %v334 = vld [vmem:[#allocation7 + $0x70] sm:$0xff]
        %v335 = vld [vmem:[#allocation7 + $0x78] sm:$0xff]
        %336 = vmatprep.subr.mxu0 0.0
        %337 = vmatpush1.msra.mxu0 %v320
        %338 = vmatprep.subr.mxu0 0.0
        %339 = vmatpush1.msra.mxu0 %v321
        %340 = vmatprep.subr.mxu0 0.0
        %341 = vmatpush1.msra.mxu0 %v322
        %342 = vmatprep.subr.mxu0 0.0
        %343 = vmatpush1.msra.mxu0 %v323
        %344 = vmatprep.subr.mxu0 0.0
        %345 = vmatpush1.msra.mxu0 %v324
        %346 = vmatprep.subr.mxu0 0.0
        %347 = vmatpush1.msra.mxu0 %v325
        %348 = vmatprep.subr.mxu0 0.0
        %349 = vmatpush1.msra.mxu0 %v326
        %350 = vmatprep.subr.mxu0 0.0
        %351 = vmatpush1.msra.mxu0 %v327
        %352 = vmatprep.subr.mxu0 0.0
        %353 = vmatpush1.msra.mxu0 %v328
        %354 = vmatprep.subr.mxu0 0.0
        %355 = vmatpush1.msra.mxu0 %v329
        %356 = vmatprep.subr.mxu0 0.0
        %357 = vmatpush1.msra.mxu0 %v330
        %358 = vmatprep.subr.mxu0 0.0
        %359 = vmatpush1.msra.mxu0 %v331
        %360 = vmatprep.subr.mxu0 0.0
        %361 = vmatpush1.msra.mxu0 %v332
        %362 = vmatprep.subr.mxu0 0.0
        %363 = vmatpush1.msra.mxu0 %v333
        %364 = vmatprep.subr.mxu0 0.0
        %365 = vmatpush1.msra.mxu0 %v334
        %366 = vmatprep.subr.mxu0 0.0
        %367 = vmatpush1.msra.mxu0 %v335
        %368 = vmatprep.subr.mxu0 0.0
        %369 = vmatpush1.msra.mxu0 0.0
        %370 = vmatprep.subr.mxu0 0.0
        %371 = vmatpush1.msra.mxu0 0.0
        %372 = vmatprep.subr.mxu0 0.0
        %373 = vmatpush1.msra.mxu0 0.0
        %374 = vmatprep.subr.mxu0 0.0
        %375 = vmatpush1.msra.mxu0 0.0
        %376 = vmatprep.subr.mxu0 0.0
        %377 = vmatpush1.msra.mxu0 0.0
        %378 = vmatprep.subr.mxu0 0.0
        %379 = vmatpush1.msra.mxu0 0.0
        %380 = vmatprep.subr.mxu0 0.0
        %381 = vmatpush1.msra.mxu0 0.0
        %382 = vmatprep.subr.mxu0 0.0
        %383 = vmatpush1.msra.mxu0 0.0
        %384 = vmatprep.subr.mxu0 0.0
        %385 = vmatpush1.msra.mxu0 0.0
        %386 = vmatprep.subr.mxu0 0.0
        %387 = vmatpush1.msra.mxu0 0.0
        %388 = vmatprep.subr.mxu0 0.0
        %389 = vmatpush1.msra.mxu0 0.0
        %390 = vmatprep.subr.mxu0 0.0
        %391 = vmatpush1.msra.mxu0 0.0
        %392 = vmatprep.subr.mxu0 0.0
        %393 = vmatpush1.msra.mxu0 0.0
        %394 = vmatprep.subr.mxu0 0.0
        %395 = vmatpush1.msra.mxu0 0.0
        %396 = vmatprep.subr.mxu0 0.0
        %397 = vmatpush1.msra.mxu0 0.0
        %398 = vmatprep.subr.mxu0 0.0
        %399 = vmatpush1.msra.mxu0 0.0
        %400 = vmatprep.mubr.f32.mxu0 0.0
        %401 = vmatmul.mubr.f32.gmra.mrb[0].mxu0 %v144
        %v402 = vpop.f32.mrb[0].mxu0
        %v403 = vadd.f32 0.0, %v402
        %v404 = vpop.f32.mrb[0].mxu0
        %405 = vdwg.mxu0
        %v406 = vsub.f32 %v317, %v403
        %v407 = vsub.f32 %v406, %v95
        %v408 = vmul.f32 %v407, 2.0
        %v409 = vadd.f32 %v144, %v408
        %v410 = vsub.f32 %v409, %v138
        %v411 = vsub.f32 %v410, %v101
        %v412 = vmax.f32 %v411, 0.0
        %v413 = vmul.f32 %v233, %v108
        %414 = vmatprep.subr.mxu0 0.0
        %415 = vmatpush1.msra.mxu0 %v146
        %416 = vmatprep.subr.mxu0 0.0
        %417 = vmatpush1.msra.mxu0 %v147
        %418 = vmatprep.subr.mxu0 0.0
        %419 = vmatpush1.msra.mxu0 %v148
        %420 = vmatprep.subr.mxu0 0.0
        %421 = vmatpush1.msra.mxu0 %v149
        %422 = vmatprep.subr.mxu0 0.0
        %423 = vmatpush1.msra.mxu0 %v150
        %424 = vmatprep.subr.mxu0 0.0
        %425 = vmatpush1.msra.mxu0 %v151
        %426 = vmatprep.subr.mxu0 0.0
        %427 = vmatpush1.msra.mxu0 %v152
        %428 = vmatprep.subr.mxu0 0.0
        %429 = vmatpush1.msra.mxu0 %v153
        %430 = vmatprep.subr.mxu0 0.0
        %431 = vmatpush1.msra.mxu0 %v154
        %432 = vmatprep.subr.mxu0 0.0
        %433 = vmatpush1.msra.mxu0 %v155
        %434 = vmatprep.subr.mxu0 0.0
        %435 = vmatpush1.msra.mxu0 %v156
        %436 = vmatprep.subr.mxu0 0.0
        %437 = vmatpush1.msra.mxu0 %v157
        %438 = vmatprep.subr.mxu0 0.0
        %439 = vmatpush1.msra.mxu0 %v158
        %440 = vmatprep.subr.mxu0 0.0
        %441 = vmatpush1.msra.mxu0 %v159
        %442 = vmatprep.subr.mxu0 0.0
        %443 = vmatpush1.msra.mxu0 %v160
        %444 = vmatprep.subr.mxu0 0.0
        %445 = vmatpush1.msra.mxu0 %v161
        %446 = vmatprep.subr.mxu0 0.0
        %447 = vmatpush1.msra.mxu0 0.0
        %448 = vmatprep.subr.mxu0 0.0
        %449 = vmatpush1.msra.mxu0 0.0
        %450 = vmatprep.subr.mxu0 0.0
        %451 = vmatpush1.msra.mxu0 0.0
        %452 = vmatprep.subr.mxu0 0.0
        %453 = vmatpush1.msra.mxu0 0.0
        %454 = vmatprep.subr.mxu0 0.0
        %455 = vmatpush1.msra.mxu0 0.0
        %456 = vmatprep.subr.mxu0 0.0
        %457 = vmatpush1.msra.mxu0 0.0
        %458 = vmatprep.subr.mxu0 0.0
        %459 = vmatpush1.msra.mxu0 0.0
        %460 = vmatprep.subr.mxu0 0.0
        %461 = vmatpush1.msra.mxu0 0.0
        %462 = vmatprep.subr.mxu0 0.0
        %463 = vmatpush1.msra.mxu0 0.0
        %464 = vmatprep.subr.mxu0 0.0
        %465 = vmatpush1.msra.mxu0 0.0
        %466 = vmatprep.subr.mxu0 0.0
        %467 = vmatpush1.msra.mxu0 0.0
        %468 = vmatprep.subr.mxu0 0.0
        %469 = vmatpush1.msra.mxu0 0.0
        %470 = vmatprep.subr.mxu0 0.0
        %471 = vmatpush1.msra.mxu0 0.0
        %472 = vmatprep.subr.mxu0 0.0
        %473 = vmatpush1.msra.mxu0 0.0
        %474 = vmatprep.subr.mxu0 0.0
        %475 = vmatpush1.msra.mxu0 0.0
        %476 = vmatprep.subr.mxu0 0.0
        %477 = vmatpush1.msra.mxu0 0.0
        %478 = vmatprep.mubr.f32.mxu0 0.0
        %479 = vmatmul.mubr.f32.gmra.mrb[0].mxu0 %v412
        %v480 = vpop.f32.mrb[0].mxu0
        %v481 = vadd.f32 0.0, %v480
        %v482 = vpop.f32.mrb[0].mxu0
        %483 = vdwg.mxu0
        %v484 = vsub.f32 %v413, %v481
        %v485 = vsub.f32 %v484, %v94
        %486 = vmatprep.subr.mxu0 0.0
        %487 = vmatpush1.msra.mxu0 %v234
        %488 = vmatprep.subr.mxu0 0.0
        %489 = vmatpush1.msra.mxu0 %v235
        %490 = vmatprep.subr.mxu0 0.0
        %491 = vmatpush1.msra.mxu0 %v236
        %492 = vmatprep.subr.mxu0 0.0
        %493 = vmatpush1.msra.mxu0 %v237
        %494 = vmatprep.subr.mxu0 0.0
        %495 = vmatpush1.msra.mxu0 %v238
        %496 = vmatprep.subr.mxu0 0.0
        %497 = vmatpush1.msra.mxu0 %v239
        %498 = vmatprep.subr.mxu0 0.0
        %499 = vmatpush1.msra.mxu0 %v240
        %500 = vmatprep.subr.mxu0 0.0
        %501 = vmatpush1.msra.mxu0 %v241
        %502 = vmatprep.subr.mxu0 0.0
        %503 = vmatpush1.msra.mxu0 %v242
        %504 = vmatprep.subr.mxu0 0.0
        %505 = vmatpush1.msra.mxu0 %v243
        %506 = vmatprep.subr.mxu0 0.0
        %507 = vmatpush1.msra.mxu0 %v244
        %508 = vmatprep.subr.mxu0 0.0
        %509 = vmatpush1.msra.mxu0 %v245
        %510 = vmatprep.subr.mxu0 0.0
        %511 = vmatpush1.msra.mxu0 %v246
        %512 = vmatprep.subr.mxu0 0.0
        %513 = vmatpush1.msra.mxu0 %v247
        %514 = vmatprep.subr.mxu0 0.0
        %515 = vmatpush1.msra.mxu0 %v248
        %516 = vmatprep.subr.mxu0 0.0
        %517 = vmatpush1.msra.mxu0 %v249
        %518 = vmatprep.subr.mxu0 0.0
        %519 = vmatpush1.msra.mxu0 0.0
        %520 = vmatprep.subr.mxu0 0.0
        %521 = vmatpush1.msra.mxu0 0.0
        %522 = vmatprep.subr.mxu0 0.0
        %523 = vmatpush1.msra.mxu0 0.0
        %524 = vmatprep.subr.mxu0 0.0
        %525 = vmatpush1.msra.mxu0 0.0
        %526 = vmatprep.subr.mxu0 0.0
        %527 = vmatpush1.msra.mxu0 0.0
        %528 = vmatprep.subr.mxu0 0.0
        %529 = vmatpush1.msra.mxu0 0.0
        %530 = vmatprep.subr.mxu0 0.0
        %531 = vmatpush1.msra.mxu0 0.0
        %532 = vmatprep.subr.mxu0 0.0
        %533 = vmatpush1.msra.mxu0 0.0
        %534 = vmatprep.subr.mxu0 0.0
        %535 = vmatpush1.msra.mxu0 0.0
        %536 = vmatprep.subr.mxu0 0.0
        %537 = vmatpush1.msra.mxu0 0.0
        %538 = vmatprep.subr.mxu0 0.0
        %539 = vmatpush1.msra.mxu0 0.0
        %540 = vmatprep.subr.mxu0 0.0
        %541 = vmatpush1.msra.mxu0 0.0
        %542 = vmatprep.subr.mxu0 0.0
        %543 = vmatpush1.msra.mxu0 0.0
        %544 = vmatprep.subr.mxu0 0.0
        %545 = vmatpush1.msra.mxu0 0.0
        %546 = vmatprep.subr.mxu0 0.0
        %547 = vmatpush1.msra.mxu0 0.0
        %548 = vmatprep.subr.mxu0 0.0
        %549 = vmatpush1.msra.mxu0 0.0
        %550 = vmatprep.mubr.f32.mxu0 0.0
        %551 = vmatmul.mubr.f32.gmra.mrb[0].mxu0 %v233
        %v552 = vpop.f32.mrb[0].mxu0
        %v553 = vadd.f32 0.0, %v552
        %v554 = vpop.f32.mrb[0].mxu0
        %555 = vdwg.mxu0
        %556 = vmatprep.subr.mxu0 0.0
        %557 = vmatpush1.msra.mxu0 %v320
        %558 = vmatprep.subr.mxu0 0.0
        %559 = vmatpush1.msra.mxu0 %v321
        %560 = vmatprep.subr.mxu0 0.0
        %561 = vmatpush1.msra.mxu0 %v322
        %562 = vmatprep.subr.mxu0 0.0
        %563 = vmatpush1.msra.mxu0 %v323
        %564 = vmatprep.subr.mxu0 0.0
        %565 = vmatpush1.msra.mxu0 %v324
        %566 = vmatprep.subr.mxu0 0.0
        %567 = vmatpush1.msra.mxu0 %v325
        %568 = vmatprep.subr.mxu0 0.0
        %569 = vmatpush1.msra.mxu0 %v326
        %570 = vmatprep.subr.mxu0 0.0
        %571 = vmatpush1.msra.mxu0 %v327
        %572 = vmatprep.subr.mxu0 0.0
        %573 = vmatpush1.msra.mxu0 %v328
        %574 = vmatprep.subr.mxu0 0.0
        %575 = vmatpush1.msra.mxu0 %v329
        %576 = vmatprep.subr.mxu0 0.0
        %577 = vmatpush1.msra.mxu0 %v330
        %578 = vmatprep.subr.mxu0 0.0
        %579 = vmatpush1.msra.mxu0 %v331
        %580 = vmatprep.subr.mxu0 0.0
        %581 = vmatpush1.msra.mxu0 %v332
        %582 = vmatprep.subr.mxu0 0.0
        %583 = vmatpush1.msra.mxu0 %v333
        %584 = vmatprep.subr.mxu0 0.0
        %585 = vmatpush1.msra.mxu0 %v334
        %586 = vmatprep.subr.mxu0 0.0
        %587 = vmatpush1.msra.mxu0 %v335
        %588 = vmatprep.subr.mxu0 0.0
        %589 = vmatpush1.msra.mxu0 0.0
        %590 = vmatprep.subr.mxu0 0.0
        %591 = vmatpush1.msra.mxu0 0.0
        %592 = vmatprep.subr.mxu0 0.0
        %593 = vmatpush1.msra.mxu0 0.0
        %594 = vmatprep.subr.mxu0 0.0
        %595 = vmatpush1.msra.mxu0 0.0
        %596 = vmatprep.subr.mxu0 0.0
        %597 = vmatpush1.msra.mxu0 0.0
        %598 = vmatprep.subr.mxu0 0.0
        %599 = vmatpush1.msra.mxu0 0.0
        %600 = vmatprep.subr.mxu0 0.0
        %601 = vmatpush1.msra.mxu0 0.0
        %602 = vmatprep.subr.mxu0 0.0
        %603 = vmatpush1.msra.mxu0 0.0
        %604 = vmatprep.subr.mxu0 0.0
        %605 = vmatpush1.msra.mxu0 0.0
        %606 = vmatprep.subr.mxu0 0.0
        %607 = vmatpush1.msra.mxu0 0.0
        %608 = vmatprep.subr.mxu0 0.0
        %609 = vmatpush1.msra.mxu0 0.0
        %610 = vmatprep.subr.mxu0 0.0
        %611 = vmatpush1.msra.mxu0 0.0
        %612 = vmatprep.subr.mxu0 0.0
        %613 = vmatpush1.msra.mxu0 0.0
        %614 = vmatprep.subr.mxu0 0.0
        %615 = vmatpush1.msra.mxu0 0.0
        %616 = vmatprep.subr.mxu0 0.0
        %617 = vmatpush1.msra.mxu0 0.0
        %618 = vmatprep.subr.mxu0 0.0
        %619 = vmatpush1.msra.mxu0 0.0
        %620 = vmatprep.mubr.f32.mxu0 0.0
        %621 = vmatmul.mubr.f32.gmra.mrb[0].mxu0 %v412
        %v622 = vpop.f32.mrb[0].mxu0
        %v623 = vadd.f32 0.0, %v622
        %v624 = vpop.f32.mrb[0].mxu0
        %625 = vdwg.mxu0
        %v626 = vsub.f32 %v553, %v623
        %v627 = vsub.f32 %v626, %v95
        %v628 = vmul.f32 %v627, 2.0
        %v629 = vadd.f32 %v412, %v628
        %v630 = vsub.f32 %v629, %v407
        %v631 = vsub.f32 %v630, %v101
        %v632 = vmax.f32 %v631, 0.0
        %v633 = vmul.f32 %v485, %v108
        %634 = vmatprep.subr.mxu0 0.0
        %635 = vmatpush1.msra.mxu0 %v146
        %636 = vmatprep.subr.mxu0 0.0
        %637 = vmatpush1.msra.mxu0 %v147
        %638 = vmatprep.subr.mxu0 0.0
        %639 = vmatpush1.msra.mxu0 %v148
        %640 = vmatprep.subr.mxu0 0.0
        %641 = vmatpush1.msra.mxu0 %v149
        %642 = vmatprep.subr.mxu0 0.0
        %643 = vmatpush1.msra.mxu0 %v150
        %644 = vmatprep.subr.mxu0 0.0
        %645 = vmatpush1.msra.mxu0 %v151
        %646 = vmatprep.subr.mxu0 0.0
        %647 = vmatpush1.msra.mxu0 %v152
        %648 = vmatprep.subr.mxu0 0.0
        %649 = vmatpush1.msra.mxu0 %v153
        %650 = vmatprep.subr.mxu0 0.0
        %651 = vmatpush1.msra.mxu0 %v154
        %652 = vmatprep.subr.mxu0 0.0
        %653 = vmatpush1.msra.mxu0 %v155
        %654 = vmatprep.subr.mxu0 0.0
        %655 = vmatpush1.msra.mxu0 %v156
        %656 = vmatprep.subr.mxu0 0.0
        %657 = vmatpush1.msra.mxu0 %v157
        %658 = vmatprep.subr.mxu0 0.0
        %659 = vmatpush1.msra.mxu0 %v158
        %660 = vmatprep.subr.mxu0 0.0
        %661 = vmatpush1.msra.mxu0 %v159
        %662 = vmatprep.subr.mxu0 0.0
        %663 = vmatpush1.msra.mxu0 %v160
        %664 = vmatprep.subr.mxu0 0.0
        %665 = vmatpush1.msra.mxu0 %v161
        %666 = vmatprep.subr.mxu0 0.0
        %667 = vmatpush1.msra.mxu0 0.0
        %668 = vmatprep.subr.mxu0 0.0
        %669 = vmatpush1.msra.mxu0 0.0
        %670 = vmatprep.subr.mxu0 0.0
        %671 = vmatpush1.msra.mxu0 0.0
        %672 = vmatprep.subr.mxu0 0.0
        %673 = vmatpush1.msra.mxu0 0.0
        %674 = vmatprep.subr.mxu0 0.0
        %675 = vmatpush1.msra.mxu0 0.0
        %676 = vmatprep.subr.mxu0 0.0
        %677 = vmatpush1.msra.mxu0 0.0
        %678 = vmatprep.subr.mxu0 0.0
        %679 = vmatpush1.msra.mxu0 0.0
        %680 = vmatprep.subr.mxu0 0.0
        %681 = vmatpush1.msra.mxu0 0.0
        %682 = vmatprep.subr.mxu0 0.0
        %683 = vmatpush1.msra.mxu0 0.0
        %684 = vmatprep.subr.mxu0 0.0
        %685 = vmatpush1.msra.mxu0 0.0
        %686 = vmatprep.subr.mxu0 0.0
        %687 = vmatpush1.msra.mxu0 0.0
        %688 = vmatprep.subr.mxu0 0.0
        %689 = vmatpush1.msra.mxu0 0.0
        %690 = vmatprep.subr.mxu0 0.0
        %691 = vmatpush1.msra.mxu0 0.0
        %692 = vmatprep.subr.mxu0 0.0
        %693 = vmatpush1.msra.mxu0 0.0
        %694 = vmatprep.subr.mxu0 0.0
        %695 = vmatpush1.msra.mxu0 0.0
        %696 = vmatprep.subr.mxu0 0.0
        %697 = vmatpush1.msra.mxu0 0.0
        %698 = vmatprep.mubr.f32.mxu0 0.0
        %699 = vmatmul.mubr.f32.gmra.mrb[0].mxu0 %v632
        %v700 = vpop.f32.mrb[0].mxu0
        %v701 = vadd.f32 0.0, %v700
        %v702 = vpop.f32.mrb[0].mxu0
        %703 = vdwg.mxu0
        %v704 = vsub.f32 %v633, %v701
        %v705 = vsub.f32 %v704, %v94
        %706 = vmatprep.subr.mxu0 0.0
        %707 = vmatpush1.msra.mxu0 %v234
        %708 = vmatprep.subr.mxu0 0.0
        %709 = vmatpush1.msra.mxu0 %v235
        %710 = vmatprep.subr.mxu0 0.0
        %711 = vmatpush1.msra.mxu0 %v236
        %712 = vmatprep.subr.mxu0 0.0
        %713 = vmatpush1.msra.mxu0 %v237
        %714 = vmatprep.subr.mxu0 0.0
        %715 = vmatpush1.msra.mxu0 %v238
        %716 = vmatprep.subr.mxu0 0.0
        %717 = vmatpush1.msra.mxu0 %v239
        %718 = vmatprep.subr.mxu0 0.0
        %719 = vmatpush1.msra.mxu0 %v240
        %720 = vmatprep.subr.mxu0 0.0
        %721 = vmatpush1.msra.mxu0 %v241
        %722 = vmatprep.subr.mxu0 0.0
        %723 = vmatpush1.msra.mxu0 %v242
        %724 = vmatprep.subr.mxu0 0.0
        %725 = vmatpush1.msra.mxu0 %v243
        %726 = vmatprep.subr.mxu0 0.0
        %727 = vmatpush1.msra.mxu0 %v244
        %728 = vmatprep.subr.mxu0 0.0
        %729 = vmatpush1.msra.mxu0 %v245
        %730 = vmatprep.subr.mxu0 0.0
        %731 = vmatpush1.msra.mxu0 %v246
        %732 = vmatprep.subr.mxu0 0.0
        %733 = vmatpush1.msra.mxu0 %v247
        %734 = vmatprep.subr.mxu0 0.0
        %735 = vmatpush1.msra.mxu0 %v248
        %736 = vmatprep.subr.mxu0 0.0
        %737 = vmatpush1.msra.mxu0 %v249
        %738 = vmatprep.subr.mxu0 0.0
        %739 = vmatpush1.msra.mxu0 0.0
        %740 = vmatprep.subr.mxu0 0.0
        %741 = vmatpush1.msra.mxu0 0.0
        %742 = vmatprep.subr.mxu0 0.0
        %743 = vmatpush1.msra.mxu0 0.0
        %744 = vmatprep.subr.mxu0 0.0
        %745 = vmatpush1.msra.mxu0 0.0
        %746 = vmatprep.subr.mxu0 0.0
        %747 = vmatpush1.msra.mxu0 0.0
        %748 = vmatprep.subr.mxu0 0.0
        %749 = vmatpush1.msra.mxu0 0.0
        %750 = vmatprep.subr.mxu0 0.0
        %751 = vmatpush1.msra.mxu0 0.0
        %752 = vmatprep.subr.mxu0 0.0
        %753 = vmatpush1.msra.mxu0 0.0
        %754 = vmatprep.subr.mxu0 0.0
        %755 = vmatpush1.msra.mxu0 0.0
        %756 = vmatprep.subr.mxu0 0.0
        %757 = vmatpush1.msra.mxu0 0.0
        %758 = vmatprep.subr.mxu0 0.0
        %759 = vmatpush1.msra.mxu0 0.0
        %760 = vmatprep.subr.mxu0 0.0
        %761 = vmatpush1.msra.mxu0 0.0
        %762 = vmatprep.subr.mxu0 0.0
        %763 = vmatpush1.msra.mxu0 0.0
        %764 = vmatprep.subr.mxu0 0.0
        %765 = vmatpush1.msra.mxu0 0.0
        %766 = vmatprep.subr.mxu0 0.0
        %767 = vmatpush1.msra.mxu0 0.0
        %768 = vmatprep.subr.mxu0 0.0
        %769 = vmatpush1.msra.mxu0 0.0
        %770 = vmatprep.mubr.f32.mxu0 0.0
        %771 = vmatmul.mubr.f32.gmra.mrb[0].mxu0 %v485
        %v772 = vpop.f32.mrb[0].mxu0
        %v773 = vadd.f32 0.0, %v772
        %v774 = vpop.f32.mrb[0].mxu0
        %775 = vdwg.mxu0
        %776 = vmatprep.subr.mxu0 0.0
        %777 = vmatpush1.msra.mxu0 %v320
        %778 = vmatprep.subr.mxu0 0.0
        %779 = vmatpush1.msra.mxu0 %v321
        %780 = vmatprep.subr.mxu0 0.0
        %781 = vmatpush1.msra.mxu0 %v322
        %782 = vmatprep.subr.mxu0 0.0
        %783 = vmatpush1.msra.mxu0 %v323
        %784 = vmatprep.subr.mxu0 0.0
        %785 = vmatpush1.msra.mxu0 %v324
        %786 = vmatprep.subr.mxu0 0.0
        %787 = vmatpush1.msra.mxu0 %v325
        %788 = vmatprep.subr.mxu0 0.0
        %789 = vmatpush1.msra.mxu0 %v326
        %790 = vmatprep.subr.mxu0 0.0
        %791 = vmatpush1.msra.mxu0 %v327
        %792 = vmatprep.subr.mxu0 0.0
        %793 = vmatpush1.msra.mxu0 %v328
        %794 = vmatprep.subr.mxu0 0.0
        %795 = vmatpush1.msra.mxu0 %v329
        %796 = vmatprep.subr.mxu0 0.0
        %797 = vmatpush1.msra.mxu0 %v330
        %798 = vmatprep.subr.mxu0 0.0
        %799 = vmatpush1.msra.mxu0 %v331
        %800 = vmatprep.subr.mxu0 0.0
        %801 = vmatpush1.msra.mxu0 %v332
        %802 = vmatprep.subr.mxu0 0.0
        %803 = vmatpush1.msra.mxu0 %v333
        %804 = vmatprep.subr.mxu0 0.0
        %805 = vmatpush1.msra.mxu0 %v334
        %806 = vmatprep.subr.mxu0 0.0
        %807 = vmatpush1.msra.mxu0 %v335
        %808 = vmatprep.subr.mxu0 0.0
        %809 = vmatpush1.msra.mxu0 0.0
        %810 = vmatprep.subr.mxu0 0.0
        %811 = vmatpush1.msra.mxu0 0.0
        %812 = vmatprep.subr.mxu0 0.0
        %813 = vmatpush1.msra.mxu0 0.0
        %814 = vmatprep.subr.mxu0 0.0
        %815 = vmatpush1.msra.mxu0 0.0
        %816 = vmatprep.subr.mxu0 0.0
        %817 = vmatpush1.msra.mxu0 0.0
        %818 = vmatprep.subr.mxu0 0.0
        %819 = vmatpush1.msra.mxu0 0.0
        %820 = vmatprep.subr.mxu0 0.0
        %821 = vmatpush1.msra.mxu0 0.0
        %822 = vmatprep.subr.mxu0 0.0
        %823 = vmatpush1.msra.mxu0 0.0
        %824 = vmatprep.subr.mxu0 0.0
        %825 = vmatpush1.msra.mxu0 0.0
        %826 = vmatprep.subr.mxu0 0.0
        %827 = vmatpush1.msra.mxu0 0.0
        %828 = vmatprep.subr.mxu0 0.0
        %829 = vmatpush1.msra.mxu0 0.0
        %830 = vmatprep.subr.mxu0 0.0
        %831 = vmatpush1.msra.mxu0 0.0
        %832 = vmatprep.subr.mxu0 0.0
        %833 = vmatpush1.msra.mxu0 0.0
        %834 = vmatprep.subr.mxu0 0.0
        %835 = vmatpush1.msra.mxu0 0.0
        %836 = vmatprep.subr.mxu0 0.0
        %837 = vmatpush1.msra.mxu0 0.0
        %838 = vmatprep.subr.mxu0 0.0
        %839 = vmatpush1.msra.mxu0 0.0
        %840 = vmatprep.mubr.f32.mxu0 0.0
        %841 = vmatmul.mubr.f32.gmra.mrb[0].mxu0 %v632
        %v842 = vpop.f32.mrb[0].mxu0
        %v843 = vadd.f32 0.0, %v842
        %v844 = vpop.f32.mrb[0].mxu0
        %845 = vdwg.mxu0
        %v846 = vsub.f32 %v773, %v843
        %v847 = vsub.f32 %v846, %v95
        %v848 = vmul.f32 %v847, 2.0
        %v849 = vadd.f32 %v632, %v848
        %v850 = vsub.f32 %v849, %v627
        %v851 = vsub.f32 %v850, %v101
        %v852 = vmax.f32 %v851, 0.0
        %v853 = vmul.f32 %v705, %v108
        %854 = vmatprep.subr.mxu0 0.0
        %855 = vmatpush1.msra.mxu0 %v146
        %856 = vmatprep.subr.mxu0 0.0
        %857 = vmatpush1.msra.mxu0 %v147
        %858 = vmatprep.subr.mxu0 0.0
        %859 = vmatpush1.msra.mxu0 %v148
        %860 = vmatprep.subr.mxu0 0.0
        %861 = vmatpush1.msra.mxu0 %v149
        %862 = vmatprep.subr.mxu0 0.0
        %863 = vmatpush1.msra.mxu0 %v150
        %864 = vmatprep.subr.mxu0 0.0
        %865 = vmatpush1.msra.mxu0 %v151
        %866 = vmatprep.subr.mxu0 0.0
        %867 = vmatpush1.msra.mxu0 %v152
        %868 = vmatprep.subr.mxu0 0.0
        %869 = vmatpush1.msra.mxu0 %v153
        %870 = vmatprep.subr.mxu0 0.0
        %871 = vmatpush1.msra.mxu0 %v154
        %872 = vmatprep.subr.mxu0 0.0
        %873 = vmatpush1.msra.mxu0 %v155
        %874 = vmatprep.subr.mxu0 0.0
        %875 = vmatpush1.msra.mxu0 %v156
        %876 = vmatprep.subr.mxu0 0.0
        %877 = vmatpush1.msra.mxu0 %v157
        %878 = vmatprep.subr.mxu0 0.0
        %879 = vmatpush1.msra.mxu0 %v158
        %880 = vmatprep.subr.mxu0 0.0
        %881 = vmatpush1.msra.mxu0 %v159
        %882 = vmatprep.subr.mxu0 0.0
        %883 = vmatpush1.msra.mxu0 %v160
        %884 = vmatprep.subr.mxu0 0.0
        %885 = vmatpush1.msra.mxu0 %v161
        %886 = vmatprep.subr.mxu0 0.0
        %887 = vmatpush1.msra.mxu0 0.0
        %888 = vmatprep.subr.mxu0 0.0
        %889 = vmatpush1.msra.mxu0 0.0
        %890 = vmatprep.subr.mxu0 0.0
        %891 = vmatpush1.msra.mxu0 0.0
        %892 = vmatprep.subr.mxu0 0.0
        %893 = vmatpush1.msra.mxu0 0.0
        %894 = vmatprep.subr.mxu0 0.0
        %895 = vmatpush1.msra.mxu0 0.0
        %896 = vmatprep.subr.mxu0 0.0
        %897 = vmatpush1.msra.mxu0 0.0
        %898 = vmatprep.subr.mxu0 0.0
        %899 = vmatpush1.msra.mxu0 0.0
        %900 = vmatprep.subr.mxu0 0.0
        %901 = vmatpush1.msra.mxu0 0.0
        %902 = vmatprep.subr.mxu0 0.0
        %903 = vmatpush1.msra.mxu0 0.0
        %904 = vmatprep.subr.mxu0 0.0
        %905 = vmatpush1.msra.mxu0 0.0
        %906 = vmatprep.subr.mxu0 0.0
        %907 = vmatpush1.msra.mxu0 0.0
        %908 = vmatprep.subr.mxu0 0.0
        %909 = vmatpush1.msra.mxu0 0.0
        %910 = vmatprep.subr.mxu0 0.0
        %911 = vmatpush1.msra.mxu0 0.0
        %912 = vmatprep.subr.mxu0 0.0
        %913 = vmatpush1.msra.mxu0 0.0
        %914 = vmatprep.subr.mxu0 0.0
        %915 = vmatpush1.msra.mxu0 0.0
        %916 = vmatprep.subr.mxu0 0.0
        %917 = vmatpush1.msra.mxu0 0.0
        %918 = vmatprep.mubr.f32.mxu0 0.0
        %919 = vmatmul.mubr.f32.gmra.mrb[0].mxu0 %v852
        %v920 = vpop.f32.mrb[0].mxu0
        %v921 = vadd.f32 0.0, %v920
        %v922 = vpop.f32.mrb[0].mxu0
        %923 = vdwg.mxu0
        %v924 = vsub.f32 %v853, %v921
        %v925 = vsub.f32 %v924, %v94
        %926 = vmatprep.subr.mxu0 0.0
        %927 = vmatpush1.msra.mxu0 %v234
        %928 = vmatprep.subr.mxu0 0.0
        %929 = vmatpush1.msra.mxu0 %v235
        %930 = vmatprep.subr.mxu0 0.0
        %931 = vmatpush1.msra.mxu0 %v236
        %932 = vmatprep.subr.mxu0 0.0
        %933 = vmatpush1.msra.mxu0 %v237
        %934 = vmatprep.subr.mxu0 0.0
        %935 = vmatpush1.msra.mxu0 %v238
        %936 = vmatprep.subr.mxu0 0.0
        %937 = vmatpush1.msra.mxu0 %v239
        %938 = vmatprep.subr.mxu0 0.0
        %939 = vmatpush1.msra.mxu0 %v240
        %940 = vmatprep.subr.mxu0 0.0
        %941 = vmatpush1.msra.mxu0 %v241
        %942 = vmatprep.subr.mxu0 0.0
        %943 = vmatpush1.msra.mxu0 %v242
        %944 = vmatprep.subr.mxu0 0.0
        %945 = vmatpush1.msra.mxu0 %v243
        %946 = vmatprep.subr.mxu0 0.0
        %947 = vmatpush1.msra.mxu0 %v244
        %948 = vmatprep.subr.mxu0 0.0
        %949 = vmatpush1.msra.mxu0 %v245
        %950 = vmatprep.subr.mxu0 0.0
        %951 = vmatpush1.msra.mxu0 %v246
        %952 = vmatprep.subr.mxu0 0.0
        %953 = vmatpush1.msra.mxu0 %v247
        %954 = vmatprep.subr.mxu0 0.0
        %955 = vmatpush1.msra.mxu0 %v248
        %956 = vmatprep.subr.mxu0 0.0
        %957 = vmatpush1.msra.mxu0 %v249
        %958 = vmatprep.subr.mxu0 0.0
        %959 = vmatpush1.msra.mxu0 0.0
        %960 = vmatprep.subr.mxu0 0.0
        %961 = vmatpush1.msra.mxu0 0.0
        %962 = vmatprep.subr.mxu0 0.0
        %963 = vmatpush1.msra.mxu0 0.0
        %964 = vmatprep.subr.mxu0 0.0
        %965 = vmatpush1.msra.mxu0 0.0
        %966 = vmatprep.subr.mxu0 0.0
        %967 = vmatpush1.msra.mxu0 0.0
        %968 = vmatprep.subr.mxu0 0.0
        %969 = vmatpush1.msra.mxu0 0.0
        %970 = vmatprep.subr.mxu0 0.0
        %971 = vmatpush1.msra.mxu0 0.0
        %972 = vmatprep.subr.mxu0 0.0
        %973 = vmatpush1.msra.mxu0 0.0
        %974 = vmatprep.subr.mxu0 0.0
        %975 = vmatpush1.msra.mxu0 0.0
        %976 = vmatprep.subr.mxu0 0.0
        %977 = vmatpush1.msra.mxu0 0.0
        %978 = vmatprep.subr.mxu0 0.0
        %979 = vmatpush1.msra.mxu0 0.0
        %980 = vmatprep.subr.mxu0 0.0
        %981 = vmatpush1.msra.mxu0 0.0
        %982 = vmatprep.subr.mxu0 0.0
        %983 = vmatpush1.msra.mxu0 0.0
        %984 = vmatprep.subr.mxu0 0.0
        %985 = vmatpush1.msra.mxu0 0.0
        %986 = vmatprep.subr.mxu0 0.0
        %987 = vmatpush1.msra.mxu0 0.0
        %988 = vmatprep.subr.mxu0 0.0
        %989 = vmatpush1.msra.mxu0 0.0
        %990 = vmatprep.mubr.f32.mxu0 0.0
        %991 = vmatmul.mubr.f32.gmra.mrb[0].mxu0 %v705
        %v992 = vpop.f32.mrb[0].mxu0
        %v993 = vadd.f32 0.0, %v992
        %v994 = vpop.f32.mrb[0].mxu0
        %995 = vdwg.mxu0
        %996 = vmatprep.subr.mxu0 0.0
        %997 = vmatpush1.msra.mxu0 %v320
        %998 = vmatprep.subr.mxu0 0.0
        %999 = vmatpush1.msra.mxu0 %v321
        %1000 = vmatprep.subr.mxu0 0.0
        %1001 = vmatpush1.msra.mxu0 %v322
        %1002 = vmatprep.subr.mxu0 0.0
        %1003 = vmatpush1.msra.mxu0 %v323
        %1004 = vmatprep.subr.mxu0 0.0
        %1005 = vmatpush1.msra.mxu0 %v324
        %1006 = vmatprep.subr.mxu0 0.0
        %1007 = vmatpush1.msra.mxu0 %v325
        %1008 = vmatprep.subr.mxu0 0.0
        %1009 = vmatpush1.msra.mxu0 %v326
        %1010 = vmatprep.subr.mxu0 0.0
        %1011 = vmatpush1.msra.mxu0 %v327
        %1012 = vmatprep.subr.mxu0 0.0
        %1013 = vmatpush1.msra.mxu0 %v328
        %1014 = vmatprep.subr.mxu0 0.0
        %1015 = vmatpush1.msra.mxu0 %v329
        %1016 = vmatprep.subr.mxu0 0.0
        %1017 = vmatpush1.msra.mxu0 %v330
        %1018 = vmatprep.subr.mxu0 0.0
        %1019 = vmatpush1.msra.mxu0 %v331
        %1020 = vmatprep.subr.mxu0 0.0
        %1021 = vmatpush1.msra.mxu0 %v332
        %1022 = vmatprep.subr.mxu0 0.0
        %1023 = vmatpush1.msra.mxu0 %v333
        %1024 = vmatprep.subr.mxu0 0.0
        %1025 = vmatpush1.msra.mxu0 %v334
        %1026 = vmatprep.subr.mxu0 0.0
        %1027 = vmatpush1.msra.mxu0 %v335
        %1028 = vmatprep.subr.mxu0 0.0
        %1029 = vmatpush1.msra.mxu0 0.0
        %1030 = vmatprep.subr.mxu0 0.0
        %1031 = vmatpush1.msra.mxu0 0.0
        %1032 = vmatprep.subr.mxu0 0.0
        %1033 = vmatpush1.msra.mxu0 0.0
        %1034 = vmatprep.subr.mxu0 0.0
        %1035 = vmatpush1.msra.mxu0 0.0
        %1036 = vmatprep.subr.mxu0 0.0
        %1037 = vmatpush1.msra.mxu0 0.0
        %1038 = vmatprep.subr.mxu0 0.0
        %1039 = vmatpush1.msra.mxu0 0.0
        %1040 = vmatprep.subr.mxu0 0.0
        %1041 = vmatpush1.msra.mxu0 0.0
        %1042 = vmatprep.subr.mxu0 0.0
        %1043 = vmatpush1.msra.mxu0 0.0
        %1044 = vmatprep.subr.mxu0 0.0
        %1045 = vmatpush1.msra.mxu0 0.0
        %1046 = vmatprep.subr.mxu0 0.0
        %1047 = vmatpush1.msra.mxu0 0.0
        %1048 = vmatprep.subr.mxu0 0.0
        %1049 = vmatpush1.msra.mxu0 0.0
        %1050 = vmatprep.subr.mxu0 0.0
        %1051 = vmatpush1.msra.mxu0 0.0
        %1052 = vmatprep.subr.mxu0 0.0
        %1053 = vmatpush1.msra.mxu0 0.0
        %1054 = vmatprep.subr.mxu0 0.0
        %1055 = vmatpush1.msra.mxu0 0.0
        %1056 = vmatprep.subr.mxu0 0.0
        %1057 = vmatpush1.msra.mxu0 0.0
        %1058 = vmatprep.subr.mxu0 0.0
        %1059 = vmatpush1.msra.mxu0 0.0
        %1060 = vmatprep.mubr.f32.mxu0 0.0
        %1061 = vmatmul.mubr.f32.gmra.mrb[0].mxu0 %v852
        %v1062 = vpop.f32.mrb[0].mxu0
        %v1063 = vadd.f32 0.0, %v1062
        %v1064 = vpop.f32.mrb[0].mxu0
        %1065 = vdwg.mxu0
        %v1066 = vsub.f32 %v993, %v1063
        %v1067 = vsub.f32 %v1066, %v95
      $region65: #{tpu_custom_call.1} parent=57 // loop_footer
        %s135 = sadd.s32 1, %s131
      $region66: #{tpu_custom_call.1} parent=57 // loop_footer_branch
        %130 = sbr.rel target = $region62
      $region67: #{tpu_custom_call.1} parent=57 // loop_exit
        _
      %v1068 = vsub.f32 %v136, %v118
      %v1069 = vand.u32 2147483647, %v1068
      %1070 = vmax.xlane.f32.xlu0 %v1069
      %v1071 = vpop.xlane.xlu0 %1070
      %v1072 = vrot.slane %v1071, 4
      %v1073 = vmax.f32 %v1071, %v1072
      %v1074 = vrot.slane %v1073, 2
      %v1075 = vmax.f32 %v1073, %v1074
      %v1076 = vrot.slane %v1075, 1
      %v1077 = vmax.f32 %v1075, %v1076
      %s1078 = vtos %v1077
      %v1079 = vand.u32 2147483647, %v136
      %1080 = vmax.xlane.f32.xlu0 %v1079
      %v1081 = vpop.xlane.xlu0 %1080
      %v1082 = vrot.slane %v1081, 4
      %v1083 = vmax.f32 %v1081, %v1082
      %v1084 = vrot.slane %v1083, 2
      %v1085 = vmax.f32 %v1083, %v1084
      %v1086 = vrot.slane %v1085, 1
      %v1087 = vmax.f32 %v1085, %v1086
      %s1088 = vtos %v1087
      %s1089 = smax.f32 %s1088, 1.0
      %v1090 = vsub.f32 %v138, %v101
      %v1091 = vmul.f32 %v1090, %v115
      %v1092 = vmax.f32 %v1091, 0.0
      %1093 = vmax.xlane.f32.xlu0 %v1092
      %v1094 = vpop.xlane.xlu0 %1093
      %v1095 = vrot.slane %v1094, 4
      %v1096 = vmax.f32 %v1094, %v1095
      %v1097 = vrot.slane %v1096, 2
      %v1098 = vmax.f32 %v1096, %v1097
      %v1099 = vrot.slane %v1098, 1
      %v1100 = vmax.f32 %v1098, %v1099
      %s1101 = vtos %v1100
      %s1102 = smul.f32 %s1089, 0.0001
      %p1103 = scmp.lt.f32.partialorder %s1078, %s1102
      %p1104 = scmp.lt.f32.partialorder %s1101, 0.01
      %p1105 = pnand %p1103, %p1104
      %p1106 = pneg %p1105
      %s1107 = sadd.s32 %s122, 1
    $region58: #{tpu_custom_call.1} parent=1 // loop_footer
      _
    $region59: #{tpu_custom_call.1} parent=1 // loop_footer_branch
      %117 = sbr.rel target = $region55
    $region60: #{tpu_custom_call.1} parent=1 // loop_exit
      _
    %1108 = vst [vmem:[#allocation11] sm:$0xff] %v118
    // Predicated region
    $region68: #{tpu_custom_call.1} parent=1 // pred_check
      _
    $region69: #{tpu_custom_call.1} parent=1 // pred_check_branch
      %1110 = sbr.rel (0) target = $region71
    $region70: #{tpu_custom_call.1} parent=1 // pred_region
      %s1112 = ssub.s32 128, 128
      %1113 = vsyncadd [#allocation4], %s1112
      %s1115 = sshll.u32 [#allocation11], 4
      %s1116 = int_to_ptr.vmem [resolvable:$true] %s1115
      %1118 = dma.vmem_to_hbm [thread:$0]  %s1116, 128, %s8, [#allocation4]
    $region71: #{tpu_custom_call.1} parent=1 // pred_fallthru
      _
    // Predicated region
    $region72: #{tpu_custom_call.1} parent=1 // pred_check
      _
    $region73: #{tpu_custom_call.1} parent=1 // pred_check_branch
      %1120 = sbr.rel (0) target = $region75
    $region74: #{tpu_custom_call.1} parent=1 // pred_region
      %1121 = dma.done [#allocation4], 128
    $region75: #{tpu_custom_call.1} parent=1 // pred_fallthru
      _
    %1122 = vsyncpa [#allocation3], 1
    %1123 = vsyncpa [#allocation6], 1
    %1124 = vsyncpa [#allocation9], 1
    %1125 = vsyncpa [#allocation4], 1

</llo_original>
